<compile_context>
chip_gen: v7x
topology: tpu7x:2x2x1
jax: 0.10.0
libtpu: 0.0.40
codegen_flags: <defaults>
</compile_context>

<pallas_src>
import functools
import math

import jax
import jax.numpy as jnp
from jax import lax
from jax.experimental import pallas as pl
from jax.experimental.pallas import tpu as pltpu


_MASK_VALUE = -1e30  # large-negative finite mask (avoids -inf - -inf = NaN edge cases)


def _mha_flash_kernel(x_q_ref, x_kv_ref, wqkv_ref, bqkv_ref, wo_ref, bo_ref,
                      o_ref, q_scr, acc_scr, m_scr, l_scr,
                      *, n_head, head_size, tq, tkv):
    C = n_head * head_size
    qi = pl.program_id(1)
    ki = pl.program_id(2)
    nk = pl.num_programs(2)

    q_start = qi * tq
    kv_start = ki * tkv

    # ---- init (once per (batch, q-block)): fused Q projection + accumulators ----
    @pl.when(ki == 0)
    def _init():
        xq = x_q_ref[0]                                            # (TQ, C) bf16
        q = jnp.dot(xq, wqkv_ref[:, :C],
                    preferred_element_type=jnp.float32) + bqkv_ref[:, :C]
        q_scr[...] = (q * (1.0 / math.sqrt(head_size))).astype(q_scr.dtype)
        m_scr[...] = jnp.full(m_scr.shape, _MASK_VALUE, dtype=m_scr.dtype)
        l_scr[...] = jnp.zeros(l_scr.shape, dtype=l_scr.dtype)
        acc_scr[...] = jnp.zeros(acc_scr.shape, dtype=acc_scr.dtype)

    # ---- per-KV-block flash update (skip KV blocks entirely above the diagonal) ----
    @pl.when(kv_start < q_start + tq)
    def _compute():
        xkv = x_kv_ref[0]                                          # (TKV, C) bf16
        kv = (jnp.dot(xkv, wqkv_ref[:, C:],
                      preferred_element_type=jnp.float32)
              + bqkv_ref[:, C:]).astype(jnp.bfloat16)              # (TKV, 2C)
        k = kv[:, :C]
        v = kv[:, C:]

        row = q_start + lax.broadcasted_iota(jnp.int32, (tq, tkv), 0)
        col = kv_start + lax.broadcasted_iota(jnp.int32, (tq, tkv), 1)
        causal = col <= row                                        # (TQ, TKV)

        for h in range(n_head):                                    # static unroll
            lo = h * head_size
            hi = lo + head_size
            q_h = q_scr[:, lo:hi]                                  # (TQ, hs) bf16, pre-scaled
            k_h = k[:, lo:hi]                                      # (TKV, hs)
            v_h = v[:, lo:hi]                                      # (TKV, hs)

            # q_h @ k_h^T on the MXU (contract last dims; no explicit transpose)
            s = lax.dot_general(q_h, k_h,
                                dimension_numbers=(((1,), (1,)), ((), ())),
                                preferred_element_type=jnp.float32)  # (TQ, TKV)
            s = jnp.where(causal, s, _MASK_VALUE)

            m_prev = m_scr[h]                                      # (TQ, 1)
            m_new = jnp.maximum(m_prev, jnp.max(s, axis=-1, keepdims=True))
            alpha = jnp.exp(m_prev - m_new)                        # (TQ, 1)
            p = jnp.exp(s - m_new)                                 # (TQ, TKV)
            l_scr[h] = alpha * l_scr[h] + jnp.sum(p, axis=-1, keepdims=True)
            acc_scr[h] = alpha * acc_scr[h] + jnp.dot(
                p.astype(jnp.bfloat16), v_h, preferred_element_type=jnp.float32)
            m_scr[h] = m_new

    # ---- finalize: normalize + per-head output projection (no head-merge transpose) ----
    @pl.when(ki == nk - 1)
    def _finalize():
        out = jnp.zeros((tq, C), jnp.float32)
        for h in range(n_head):
            lo = h * head_size
            hi = lo + head_size
            inv_l = pl.reciprocal(l_scr[h], approx=True)           # (TQ, 1) on EUP
            y_h = (acc_scr[h] * inv_l).astype(jnp.bfloat16)        # (TQ, hs)
            out = out + jnp.dot(y_h, wo_ref[lo:hi, :],
                                preferred_element_type=jnp.float32)
        out = out + bo_ref[...]
        o_ref[0] = out.astype(o_ref.dtype)
        # TODO(synk): attn_dropout / resid_dropout are identity in eval mode (not applied).


def _pick_tile(total, target):
    """Largest tile <= target that divides `total` and is a multiple of 8 (else full)."""
    if total <= target:
        return total
    t = (target // 8) * 8
    while t >= 8:
        if total % t == 0:
            return t
        t -= 8
    return total


def multi_head_attention(x, params, *, n_head, tq=None, tkv=None):
    """x: (B, T, C) float32. params: (in,out)-layout weights and (1,out) biases."""
    B, T, C = x.shape
    head_size = C // n_head

    # Fuse Q/K/V weights into a single (C, 3C) bf16 weight; biases stay f32.
    wqkv = jnp.concatenate([params['wq'], params['wk'], params['wv']],
                           axis=1).astype(jnp.bfloat16)
    bqkv = jnp.concatenate([params['bq'], params['bk'], params['bv']],
                           axis=1).astype(jnp.float32)
    wo = params['wo'].astype(jnp.bfloat16)
    bo = params['bo'].astype(jnp.float32)

    tq = _pick_tile(T, 256) if tq is None else tq
    tkv = _pick_tile(T, 512) if tkv is None else tkv
    nq = T // tq
    nk = T // tkv

    x_bf16 = x.astype(jnp.bfloat16)

    xq_spec = pl.BlockSpec((1, tq, C), lambda b, qi, ki: (b, qi, 0))
    xkv_spec = pl.BlockSpec((1, tkv, C), lambda b, qi, ki: (b, ki, 0))
    wqkv_spec = pl.BlockSpec((C, 3 * C), lambda b, qi, ki: (0, 0))
    bqkv_spec = pl.BlockSpec((1, 3 * C), lambda b, qi, ki: (0, 0))
    wo_spec = pl.BlockSpec((C, C), lambda b, qi, ki: (0, 0))
    bo_spec = pl.BlockSpec((1, C), lambda b, qi, ki: (0, 0))
    out_spec = pl.BlockSpec((1, tq, C), lambda b, qi, ki: (b, qi, 0))

    kernel = functools.partial(_mha_flash_kernel, n_head=n_head,
                               head_size=head_size, tq=tq, tkv=tkv)

    flops = int(B * (8 * T * C * C + 4 * T * T * C))
    transcendentals = int(B * n_head * T * T)
    bytes_accessed = int(2 * B * T * C * 2          # x streamed as Q tiles + KV tiles (bf16)
                         + (3 * C * C + C * C) * 2  # fused QKV + out-proj weights (bf16)
                         + (3 * C + C) * 4          # biases (f32)
                         + B * T * C * 4)           # output (f32)

    return pl.pallas_call(
        kernel,
        out_shape=jax.ShapeDtypeStruct((B, T, C), jnp.float32),
        grid_spec=pltpu.PrefetchScalarGridSpec(
            num_scalar_prefetch=0,
            grid=(B, nq, nk),
            in_specs=[xq_spec, xkv_spec, wqkv_spec, bqkv_spec, wo_spec, bo_spec],
            out_specs=out_spec,
            scratch_shapes=[
                pltpu.VMEM((tq, C), jnp.bfloat16),                     # q (pre-scaled)
                pltpu.VMEM((n_head, tq, head_size), jnp.float32),      # acc
                pltpu.VMEM((n_head, tq, 1), jnp.float32),              # running max
                pltpu.VMEM((n_head, tq, 1), jnp.float32),              # running sum
            ]),
        compiler_params=pltpu.CompilerParams(
            dimension_semantics=("parallel", "parallel", "arbitrary"),
            vmem_limit_bytes=48 * 1024 * 1024),
        cost_estimate=pl.CostEstimate(flops=flops,
                                      transcendentals=transcendentals,
                                      bytes_accessed=bytes_accessed),
    )(x_bf16, x_bf16, wqkv, bqkv, wo, bo)


def _reference(x, params, n_head):
    """Plain-JAX f32 reference replicating the PyTorch forward (eval mode)."""
    B, T, C = x.shape
    hs = C // n_head
    q = x @ params['wq'] + params['bq'][0]
    k = x @ params['wk'] + params['bk'][0]
    v = x @ params['wv'] + params['bv'][0]
    q = q.reshape(B, T, n_head, hs).transpose(0, 2, 1, 3)
    k = k.reshape(B, T, n_head, hs).transpose(0, 2, 1, 3)
    v = v.reshape(B, T, n_head, hs).transpose(0, 2, 1, 3)
    att = jnp.einsum('bhtd,bhsd->bhts', q, k) / math.sqrt(hs)
    mask = jnp.tril(jnp.ones((T, T), dtype=bool))[None, None]
    att = jnp.where(mask, att, -jnp.inf)
    att = jax.nn.softmax(att, axis=-1)
    y = jnp.einsum('bhts,bhsd->bhtd', att, v)
    y = y.transpose(0, 2, 1, 3).reshape(B, T, C)
    return y @ params['wo'] + params['bo'][0]


if __name__ == "__main__":
    # Small config consistent with the module: block_size >= T.
    B, T, C, n_head = 2, 8, 32, 4

    key = jax.random.PRNGKey(0)
    keys = jax.random.split(key, 9)

    bound = 1.0 / math.sqrt(C)  # nn.Linear default init scale

    def lin_w(k):  # stored pre-transposed as (in, out)
        return jax.random.uniform(k, (C, C), jnp.float32, -bound, bound)

    def lin_b(k):
        return jax.random.uniform(k, (1, C), jnp.float32, -bound, bound)

    params = {
        'wq': lin_w(keys[0]), 'bq': lin_b(keys[1]),
        'wk': lin_w(keys[2]), 'bk': lin_b(keys[3]),
        'wv': lin_w(keys[4]), 'bv': lin_b(keys[5]),
        'wo': lin_w(keys[6]), 'bo': lin_b(keys[7]),
    }

    x = jax.random.normal(keys[8], (B, T, C), jnp.float32)

    out = multi_head_attention(x, params, n_head=n_head)
    out = jax.block_until_ready(out)

    ref = _reference(x, params, n_head)
    assert out.shape == (B, T, C)
    max_err = float(jnp.max(jnp.abs(out - ref)))
    # bf16 matmul operands (f32 accumulation) => relaxed tolerance vs f32 reference.
    assert jnp.allclose(out, ref, atol=2e-2, rtol=2e-2), \
        f"mismatch vs reference (max |err| = {max_err})"

    print("KERNEL_OK")
</pallas_src>

<mosaic_0001>
module attributes {stable_mosaic.version = 11 : i64} {
  func.func @_mha_flash_kernel(%arg0: i32, %arg1: i32, %arg2: i32, %arg3: memref<1x8x32xbf16, #tpu.memory_space<vmem>>, %arg4: memref<1x8x32xbf16, #tpu.memory_space<vmem>>, %arg5: memref<32x96xbf16, #tpu.memory_space<vmem>>, %arg6: memref<1x96xf32, #tpu.memory_space<vmem>>, %arg7: memref<32x32xbf16, #tpu.memory_space<vmem>>, %arg8: memref<1x32xf32, #tpu.memory_space<vmem>>, %arg9: memref<1x8x32xf32, #tpu.memory_space<vmem>>, %arg10: memref<8x32xbf16, #tpu.memory_space<vmem>>, %arg11: memref<4x8x8xf32, #tpu.memory_space<vmem>>, %arg12: memref<4x8x1xf32, #tpu.memory_space<vmem>>, %arg13: memref<4x8x1xf32, #tpu.memory_space<vmem>>) attributes {dimension_semantics = [#tpu.dimension_semantics<parallel>, #tpu.dimension_semantics<parallel>, #tpu.dimension_semantics<arbitrary>], iteration_bounds = array<i64: 2, 1, 1>, scalar_prefetch = 0 : i64, scratch_operands = 4 : i64, tpu.core_type = #tpu.core_type<tc>, window_params = [{transform_indices = @transform_0, window_bounds = array<i64: 1, 8, 32>}, {transform_indices = @transform_1, window_bounds = array<i64: 1, 8, 32>}, {pipeline_mode = #tpu.pipeline_mode<synchronous>, transform_indices = @transform_2, window_bounds = array<i64: 32, 96>}, {pipeline_mode = #tpu.pipeline_mode<synchronous>, transform_indices = @transform_3, window_bounds = array<i64: 1, 96>}, {pipeline_mode = #tpu.pipeline_mode<synchronous>, transform_indices = @transform_4, window_bounds = array<i64: 32, 32>}, {pipeline_mode = #tpu.pipeline_mode<synchronous>, transform_indices = @transform_5, window_bounds = array<i64: 1, 32>}, {transform_indices = @transform_6, window_bounds = array<i64: 1, 8, 32>}]} {
    %c8_i32 = arith.constant 8 : i32
    %0 = arith.muli %arg1, %c8_i32 : i32
    %c8_i32_0 = arith.constant 8 : i32
    %1 = arith.muli %arg2, %c8_i32_0 : i32
    %c0_i32 = arith.constant 0 : i32
    %2 = arith.cmpi eq, %arg2, %c0_i32 : i32
    %3 = arith.extui %2 : i1 to i32
    %c0_i32_1 = arith.constant 0 : i32
    %4 = arith.cmpi ne, %3, %c0_i32_1 : i32
    scf.if %4 {
      %c0 = arith.constant 0 : index
      %c0_6 = arith.constant 0 : index
      %c0_7 = arith.constant 0 : index
      %12 = vector.load %arg3[%c0, %c0_6, %c0_7] : memref<1x8x32xbf16, #tpu.memory_space<vmem>>, vector<1x8x32xbf16>
      %13 = vector.shape_cast %12 : vector<1x8x32xbf16> to vector<8x32xbf16>
      %c0_8 = arith.constant 0 : index
      %c0_9 = arith.constant 0 : index
      %14 = vector.load %arg5[%c0_8, %c0_9] : memref<32x96xbf16, #tpu.memory_space<vmem>>, vector<32x32xbf16>
      %cst = arith.constant dense<0.000000e+00> : vector<8x32xf32>
      %15 = tpu.matmul %13, %14, %cst {dimension_numbers = #tpu.dot_dimension_numbers<[1], [0], [0], [1], [0, 0, 1, 1], [], []>} : vector<8x32xbf16>, vector<32x32xbf16>, vector<8x32xf32> -> vector<8x32xf32>
      %c0_10 = arith.constant 0 : index
      %c0_11 = arith.constant 0 : index
      %16 = vector.load %arg6[%c0_10, %c0_11] : memref<1x96xf32, #tpu.memory_space<vmem>>, vector<1x32xf32>
      %17 = vector.broadcast %16 : vector<1x32xf32> to vector<8x32xf32>
      %18 = arith.addf %15, %17 : vector<8x32xf32>
      %cst_12 = arith.constant 0.353553385 : f32
      %19 = vector.broadcast %cst_12 : f32 to vector<8x32xf32>
      %20 = arith.mulf %18, %19 : vector<8x32xf32>
      %21 = arith.truncf %20 : vector<8x32xf32> to vector<8x32xbf16>
      %c0_13 = arith.constant 0 : index
      %c0_14 = arith.constant 0 : index
      %22 = vector.load %arg10[%c0_13, %c0_14] : memref<8x32xbf16, #tpu.memory_space<vmem>>, vector<8x32xbf16>
      tpu.vector_store %arg10[%c0_13, %c0_14], %21 {strides = array<i32>} : memref<8x32xbf16, #tpu.memory_space<vmem>>, vector<8x32xbf16>,
      %cst_15 = arith.constant -1.000000e+30 : f32
      %23 = vector.broadcast %cst_15 : f32 to vector<4x8x1xf32>
      %c0_16 = arith.constant 0 : index
      %c0_17 = arith.constant 0 : index
      %c0_18 = arith.constant 0 : index
      %24 = vector.load %arg12[%c0_16, %c0_17, %c0_18] : memref<4x8x1xf32, #tpu.memory_space<vmem>>, vector<4x8x1xf32>
      tpu.vector_store %arg12[%c0_16, %c0_17, %c0_18], %23 {strides = array<i32>} : memref<4x8x1xf32, #tpu.memory_space<vmem>>, vector<4x8x1xf32>,
      %cst_19 = arith.constant 0.000000e+00 : f32
      %25 = vector.broadcast %cst_19 : f32 to vector<4x8x1xf32>
      %c0_20 = arith.constant 0 : index
      %c0_21 = arith.constant 0 : index
      %c0_22 = arith.constant 0 : index
      %26 = vector.load %arg13[%c0_20, %c0_21, %c0_22] : memref<4x8x1xf32, #tpu.memory_space<vmem>>, vector<4x8x1xf32>
      tpu.vector_store %arg13[%c0_20, %c0_21, %c0_22], %25 {strides = array<i32>} : memref<4x8x1xf32, #tpu.memory_space<vmem>>, vector<4x8x1xf32>,
      %cst_23 = arith.constant 0.000000e+00 : f32
      %27 = vector.broadcast %cst_23 : f32 to vector<4x8x8xf32>
      %c0_24 = arith.constant 0 : index
      %c0_25 = arith.constant 0 : index
      %c0_26 = arith.constant 0 : index
      %28 = vector.load %arg11[%c0_24, %c0_25, %c0_26] : memref<4x8x8xf32, #tpu.memory_space<vmem>>, vector<4x8x8xf32>
      tpu.vector_store %arg11[%c0_24, %c0_25, %c0_26], %27 {strides = array<i32>} : memref<4x8x8xf32, #tpu.memory_space<vmem>>, vector<4x8x8xf32>,
    } else {
    }
    %c8_i32_2 = arith.constant 8 : i32
    %5 = arith.addi %0, %c8_i32_2 : i32
    %6 = arith.cmpi slt, %1, %5 : i32
    %7 = arith.extui %6 : i1 to i32
    %c0_i32_3 = arith.constant 0 : i32
    %8 = arith.cmpi ne, %7, %c0_i32_3 : i32
    scf.if %8 {
      %c0 = arith.constant 0 : index
      %c0_6 = arith.constant 0 : index
      %c0_7 = arith.constant 0 : index
      %12 = vector.load %arg4[%c0, %c0_6, %c0_7] : memref<1x8x32xbf16, #tpu.memory_space<vmem>>, vector<1x8x32xbf16>
      %13 = vector.shape_cast %12 : vector<1x8x32xbf16> to vector<8x32xbf16>
      %c0_8 = arith.constant 0 : index
      %c32 = arith.constant 32 : index
      %14 = vector.load %arg5[%c0_8, %c32] : memref<32x96xbf16, #tpu.memory_space<vmem>>, vector<32x64xbf16>
      %cst = arith.constant dense<0.000000e+00> : vector<8x64xf32>
      %15 = tpu.matmul %13, %14, %cst {dimension_numbers = #tpu.dot_dimension_numbers<[1], [0], [0], [1], [0, 0, 1, 1], [], []>} : vector<8x32xbf16>, vector<32x64xbf16>, vector<8x64xf32> -> vector<8x64xf32>
      %c0_9 = arith.constant 0 : index
      %c32_10 = arith.constant 32 : index
      %16 = vector.load %arg6[%c0_9, %c32_10] : memref<1x96xf32, #tpu.memory_space<vmem>>, vector<1x64xf32>
      %17 = vector.broadcast %16 : vector<1x64xf32> to vector<8x64xf32>
      %18 = arith.addf %15, %17 : vector<8x64xf32>
      %19 = arith.truncf %18 : vector<8x64xf32> to vector<8x64xbf16>
      %20 = vector.extract_strided_slice %19 {offsets = [0, 0], sizes = [8, 32], strides = [1, 1]} : vector<8x64xbf16> to vector<8x32xbf16>
      %21 = vector.extract_strided_slice %19 {offsets = [0, 32], sizes = [8, 32], strides = [1, 1]} : vector<8x64xbf16> to vector<8x32xbf16>
      %22 = tpu.iota {dimensions = array<i32: 0>} : vector<8x8xi32>
      %23 = vector.broadcast %0 : i32 to vector<8x8xi32>
      %24 = arith.addi %23, %22 : vector<8x8xi32>
      %25 = tpu.iota {dimensions = array<i32: 1>} : vector<8x8xi32>
      %26 = vector.broadcast %1 : i32 to vector<8x8xi32>
      %27 = arith.addi %26, %25 : vector<8x8xi32>
      %28 = arith.cmpi sle, %27, %24 : vector<8x8xi32>
      %c0_11 = arith.constant 0 : index
      %c0_12 = arith.constant 0 : index
      %29 = vector.load %arg10[%c0_11, %c0_12] : memref<8x32xbf16, #tpu.memory_space<vmem>>, vector<8x8xbf16>
      %30 = vector.extract_strided_slice %20 {offsets = [0, 0], sizes = [8, 8], strides = [1, 1]} : vector<8x32xbf16> to vector<8x8xbf16>
      %31 = vector.extract_strided_slice %21 {offsets = [0, 0], sizes = [8, 8], strides = [1, 1]} : vector<8x32xbf16> to vector<8x8xbf16>
      %cst_13 = arith.constant dense<0.000000e+00> : vector<8x8xf32>
      %32 = tpu.matmul %29, %30, %cst_13 {dimension_numbers = #tpu.dot_dimension_numbers<[1], [1], [0], [0], [0, 0, 1, 0], [], []>} : vector<8x8xbf16>, vector<8x8xbf16>, vector<8x8xf32> -> vector<8x8xf32>
      %cst_14 = arith.constant -1.000000e+30 : f32
      %33 = vector.broadcast %cst_14 : f32 to vector<8x8xf32>
      %34 = arith.select %28, %32, %33 : vector<8x8xi1>, vector<8x8xf32>
      %c0_15 = arith.constant 0 : index
      %c0_16 = arith.constant 0 : index
      %c0_17 = arith.constant 0 : index
      %35 = vector.load %arg12[%c0_15, %c0_16, %c0_17] : memref<4x8x1xf32, #tpu.memory_space<vmem>>, vector<1x8x1xf32>
      %36 = vector.shape_cast %35 : vector<1x8x1xf32> to vector<8x1xf32>
      %cst_18 = arith.constant dense<0xFF800000> : vector<8xf32>
      %37 = vector.multi_reduction <maximumf>, %34, %cst_18 [1] : vector<8x8xf32> to vector<8xf32>
      %38 = vector.shape_cast %37 : vector<8xf32> to vector<8x1xf32>
      %39 = arith.maximumf %36, %38 : vector<8x1xf32>
      %40 = arith.subf %36, %39 : vector<8x1xf32>
      %41 = math.exp %40 : vector<8x1xf32>
      %42 = vector.broadcast %39 : vector<8x1xf32> to vector<8x8xf32>
      %43 = arith.subf %34, %42 : vector<8x8xf32>
      %44 = math.exp %43 : vector<8x8xf32>
      %c0_19 = arith.constant 0 : index
      %c0_20 = arith.constant 0 : index
      %c0_21 = arith.constant 0 : index
      %45 = vector.load %arg13[%c0_19, %c0_20, %c0_21] : memref<4x8x1xf32, #tpu.memory_space<vmem>>, vector<1x8x1xf32>
      %46 = vector.shape_cast %45 : vector<1x8x1xf32> to vector<8x1xf32>
      %47 = arith.mulf %41, %46 : vector<8x1xf32>
      %cst_22 = arith.constant dense<0.000000e+00> : vector<8xf32>
      %48 = vector.multi_reduction <add>, %44, %cst_22 [1] : vector<8x8xf32> to vector<8xf32>
      %49 = vector.shape_cast %48 : vector<8xf32> to vector<8x1xf32>
      %50 = arith.addf %47, %49 : vector<8x1xf32>
      %c0_23 = arith.constant 0 : index
      %c0_24 = arith.constant 0 : index
      %c0_25 = arith.constant 0 : index
      %51 = vector.load %arg13[%c0_23, %c0_24, %c0_25] : memref<4x8x1xf32, #tpu.memory_space<vmem>>, vector<1x8x1xf32>
      %52 = vector.shape_cast %51 : vector<1x8x1xf32> to vector<8x1xf32>
      %53 = vector.shape_cast %50 : vector<8x1xf32> to vector<1x8x1xf32>
      tpu.vector_store %arg13[%c0_23, %c0_24, %c0_25], %53 {strides = array<i32>} : memref<4x8x1xf32, #tpu.memory_space<vmem>>, vector<1x8x1xf32>,
      %c0_26 = arith.constant 0 : index
      %c0_27 = arith.constant 0 : index
      %c0_28 = arith.constant 0 : index
      %54 = vector.load %arg11[%c0_26, %c0_27, %c0_28] : memref<4x8x8xf32, #tpu.memory_space<vmem>>, vector<1x8x8xf32>
      %55 = vector.shape_cast %54 : vector<1x8x8xf32> to vector<8x8xf32>
      %56 = vector.broadcast %41 : vector<8x1xf32> to vector<8x8xf32>
      %57 = arith.mulf %56, %55 : vector<8x8xf32>
      %58 = arith.truncf %44 : vector<8x8xf32> to vector<8x8xbf16>
      %cst_29 = arith.constant dense<0.000000e+00> : vector<8x8xf32>
      %59 = tpu.matmul %58, %31, %cst_29 {dimension_numbers = #tpu.dot_dimension_numbers<[1], [0], [0], [1], [0, 0, 1, 1], [], []>} : vector<8x8xbf16>, vector<8x8xbf16>, vector<8x8xf32> -> vector<8x8xf32>
      %60 = arith.addf %57, %59 : vector<8x8xf32>
      %c0_30 = arith.constant 0 : index
      %c0_31 = arith.constant 0 : index
      %c0_32 = arith.constant 0 : index
      %61 = vector.load %arg11[%c0_30, %c0_31, %c0_32] : memref<4x8x8xf32, #tpu.memory_space<vmem>>, vector<1x8x8xf32>
      %62 = vector.shape_cast %61 : vector<1x8x8xf32> to vector<8x8xf32>
      %63 = vector.shape_cast %60 : vector<8x8xf32> to vector<1x8x8xf32>
      tpu.vector_store %arg11[%c0_30, %c0_31, %c0_32], %63 {strides = array<i32>} : memref<4x8x8xf32, #tpu.memory_space<vmem>>, vector<1x8x8xf32>,
      %c0_33 = arith.constant 0 : index
      %c0_34 = arith.constant 0 : index
      %c0_35 = arith.constant 0 : index
      %64 = vector.load %arg12[%c0_33, %c0_34, %c0_35] : memref<4x8x1xf32, #tpu.memory_space<vmem>>, vector<1x8x1xf32>
      %65 = vector.shape_cast %64 : vector<1x8x1xf32> to vector<8x1xf32>
      %66 = vector.shape_cast %39 : vector<8x1xf32> to vector<1x8x1xf32>
      tpu.vector_store %arg12[%c0_33, %c0_34, %c0_35], %66 {strides = array<i32>} : memref<4x8x1xf32, #tpu.memory_space<vmem>>, vector<1x8x1xf32>,
      %c0_36 = arith.constant 0 : index
      %c8 = arith.constant 8 : index
      %67 = vector.load %arg10[%c0_36, %c8] : memref<8x32xbf16, #tpu.memory_space<vmem>>, vector<8x8xbf16>
      %68 = vector.extract_strided_slice %20 {offsets = [0, 8], sizes = [8, 8], strides = [1, 1]} : vector<8x32xbf16> to vector<8x8xbf16>
      %69 = vector.extract_strided_slice %21 {offsets = [0, 8], sizes = [8, 8], strides = [1, 1]} : vector<8x32xbf16> to vector<8x8xbf16>
      %cst_37 = arith.constant dense<0.000000e+00> : vector<8x8xf32>
      %70 = tpu.matmul %67, %68, %cst_37 {dimension_numbers = #tpu.dot_dimension_numbers<[1], [1], [0], [0], [0, 0, 1, 0], [], []>} : vector<8x8xbf16>, vector<8x8xbf16>, vector<8x8xf32> -> vector<8x8xf32>
      %cst_38 = arith.constant -1.000000e+30 : f32
      %71 = vector.broadcast %cst_38 : f32 to vector<8x8xf32>
      %72 = arith.select %28, %70, %71 : vector<8x8xi1>, vector<8x8xf32>
      %c1 = arith.constant 1 : index
      %c0_39 = arith.constant 0 : index
      %c0_40 = arith.constant 0 : index
      %73 = vector.load %arg12[%c1, %c0_39, %c0_40] : memref<4x8x1xf32, #tpu.memory_space<vmem>>, vector<1x8x1xf32>
      %74 = vector.shape_cast %73 : vector<1x8x1xf32> to vector<8x1xf32>
      %cst_41 = arith.constant dense<0xFF800000> : vector<8xf32>
      %75 = vector.multi_reduction <maximumf>, %72, %cst_41 [1] : vector<8x8xf32> to vector<8xf32>
      %76 = vector.shape_cast %75 : vector<8xf32> to vector<8x1xf32>
      %77 = arith.maximumf %74, %76 : vector<8x1xf32>
      %78 = arith.subf %74, %77 : vector<8x1xf32>
      %79 = math.exp %78 : vector<8x1xf32>
      %80 = vector.broadcast %77 : vector<8x1xf32> to vector<8x8xf32>
      %81 = arith.subf %72, %80 : vector<8x8xf32>
      %82 = math.exp %81 : vector<8x8xf32>
      %c1_42 = arith.constant 1 : index
      %c0_43 = arith.constant 0 : index
      %c0_44 = arith.constant 0 : index
      %83 = vector.load %arg13[%c1_42, %c0_43, %c0_44] : memref<4x8x1xf32, #tpu.memory_space<vmem>>, vector<1x8x1xf32>
      %84 = vector.shape_cast %83 : vector<1x8x1xf32> to vector<8x1xf32>
      %85 = arith.mulf %79, %84 : vector<8x1xf32>
      %cst_45 = arith.constant dense<0.000000e+00> : vector<8xf32>
      %86 = vector.multi_reduction <add>, %82, %cst_45 [1] : vector<8x8xf32> to vector<8xf32>
      %87 = vector.shape_cast %86 : vector<8xf32> to vector<8x1xf32>
      %88 = arith.addf %85, %87 : vector<8x1xf32>
      %c1_46 = arith.constant 1 : index
      %c0_47 = arith.constant 0 : index
      %c0_48 = arith.constant 0 : index
      %89 = vector.load %arg13[%c1_46, %c0_47, %c0_48] : memref<4x8x1xf32, #tpu.memory_space<vmem>>, vector<1x8x1xf32>
      %90 = vector.shape_cast %89 : vector<1x8x1xf32> to vector<8x1xf32>
      %91 = vector.shape_cast %88 : vector<8x1xf32> to vector<1x8x1xf32>
      tpu.vector_store %arg13[%c1_46, %c0_47, %c0_48], %91 {strides = array<i32>} : memref<4x8x1xf32, #tpu.memory_space<vmem>>, vector<1x8x1xf32>,
      %c1_49 = arith.constant 1 : index
      %c0_50 = arith.constant 0 : index
      %c0_51 = arith.constant 0 : index
      %92 = vector.load %arg11[%c1_49, %c0_50, %c0_51] : memref<4x8x8xf32, #tpu.memory_space<vmem>>, vector<1x8x8xf32>
      %93 = vector.shape_cast %92 : vector<1x8x8xf32> to vector<8x8xf32>
      %94 = vector.broadcast %79 : vector<8x1xf32> to vector<8x8xf32>
      %95 = arith.mulf %94, %93 : vector<8x8xf32>
      %96 = arith.truncf %82 : vector<8x8xf32> to vector<8x8xbf16>
      %cst_52 = arith.constant dense<0.000000e+00> : vector<8x8xf32>
      %97 = tpu.matmul %96, %69, %cst_52 {dimension_numbers = #tpu.dot_dimension_numbers<[1], [0], [0], [1], [0, 0, 1, 1], [], []>} : vector<8x8xbf16>, vector<8x8xbf16>, vector<8x8xf32> -> vector<8x8xf32>
      %98 = arith.addf %95, %97 : vector<8x8xf32>
      %c1_53 = arith.constant 1 : index
      %c0_54 = arith.constant 0 : index
      %c0_55 = arith.constant 0 : index
      %99 = vector.load %arg11[%c1_53, %c0_54, %c0_55] : memref<4x8x8xf32, #tpu.memory_space<vmem>>, vector<1x8x8xf32>
      %100 = vector.shape_cast %99 : vector<1x8x8xf32> to vector<8x8xf32>
      %101 = vector.shape_cast %98 : vector<8x8xf32> to vector<1x8x8xf32>
      tpu.vector_store %arg11[%c1_53, %c0_54, %c0_55], %101 {strides = array<i32>} : memref<4x8x8xf32, #tpu.memory_space<vmem>>, vector<1x8x8xf32>,
      %c1_56 = arith.constant 1 : index
      %c0_57 = arith.constant 0 : index
      %c0_58 = arith.constant 0 : index
      %102 = vector.load %arg12[%c1_56, %c0_57, %c0_58] : memref<4x8x1xf32, #tpu.memory_space<vmem>>, vector<1x8x1xf32>
      %103 = vector.shape_cast %102 : vector<1x8x1xf32> to vector<8x1xf32>
      %104 = vector.shape_cast %77 : vector<8x1xf32> to vector<1x8x1xf32>
      tpu.vector_store %arg12[%c1_56, %c0_57, %c0_58], %104 {strides = array<i32>} : memref<4x8x1xf32, #tpu.memory_space<vmem>>, vector<1x8x1xf32>,
      %c0_59 = arith.constant 0 : index
      %c16 = arith.constant 16 : index
      %105 = vector.load %arg10[%c0_59, %c16] : memref<8x32xbf16, #tpu.memory_space<vmem>>, vector<8x8xbf16>
      %106 = vector.extract_strided_slice %20 {offsets = [0, 16], sizes = [8, 8], strides = [1, 1]} : vector<8x32xbf16> to vector<8x8xbf16>
      %107 = vector.extract_strided_slice %21 {offsets = [0, 16], sizes = [8, 8], strides = [1, 1]} : vector<8x32xbf16> to vector<8x8xbf16>
      %cst_60 = arith.constant dense<0.000000e+00> : vector<8x8xf32>
      %108 = tpu.matmul %105, %106, %cst_60 {dimension_numbers = #tpu.dot_dimension_numbers<[1], [1], [0], [0], [0, 0, 1, 0], [], []>} : vector<8x8xbf16>, vector<8x8xbf16>, vector<8x8xf32> -> vector<8x8xf32>
      %cst_61 = arith.constant -1.000000e+30 : f32
      %109 = vector.broadcast %cst_61 : f32 to vector<8x8xf32>
      %110 = arith.select %28, %108, %109 : vector<8x8xi1>, vector<8x8xf32>
      %c2 = arith.constant 2 : index
      %c0_62 = arith.constant 0 : index
      %c0_63 = arith.constant 0 : index
      %111 = vector.load %arg12[%c2, %c0_62, %c0_63] : memref<4x8x1xf32, #tpu.memory_space<vmem>>, vector<1x8x1xf32>
      %112 = vector.shape_cast %111 : vector<1x8x1xf32> to vector<8x1xf32>
      %cst_64 = arith.constant dense<0xFF800000> : vector<8xf32>
      %113 = vector.multi_reduction <maximumf>, %110, %cst_64 [1] : vector<8x8xf32> to vector<8xf32>
      %114 = vector.shape_cast %113 : vector<8xf32> to vector<8x1xf32>
      %115 = arith.maximumf %112, %114 : vector<8x1xf32>
      %116 = arith.subf %112, %115 : vector<8x1xf32>
      %117 = math.exp %116 : vector<8x1xf32>
      %118 = vector.broadcast %115 : vector<8x1xf32> to vector<8x8xf32>
      %119 = arith.subf %110, %118 : vector<8x8xf32>
      %120 = math.exp %119 : vector<8x8xf32>
      %c2_65 = arith.constant 2 : index
      %c0_66 = arith.constant 0 : index
      %c0_67 = arith.constant 0 : index
      %121 = vector.load %arg13[%c2_65, %c0_66, %c0_67] : memref<4x8x1xf32, #tpu.memory_space<vmem>>, vector<1x8x1xf32>
      %122 = vector.shape_cast %121 : vector<1x8x1xf32> to vector<8x1xf32>
      %123 = arith.mulf %117, %122 : vector<8x1xf32>
      %cst_68 = arith.constant dense<0.000000e+00> : vector<8xf32>
      %124 = vector.multi_reduction <add>, %120, %cst_68 [1] : vector<8x8xf32> to vector<8xf32>
      %125 = vector.shape_cast %124 : vector<8xf32> to vector<8x1xf32>
      %126 = arith.addf %123, %125 : vector<8x1xf32>
      %c2_69 = arith.constant 2 : index
      %c0_70 = arith.constant 0 : index
      %c0_71 = arith.constant 0 : index
      %127 = vector.load %arg13[%c2_69, %c0_70, %c0_71] : memref<4x8x1xf32, #tpu.memory_space<vmem>>, vector<1x8x1xf32>
      %128 = vector.shape_cast %127 : vector<1x8x1xf32> to vector<8x1xf32>
      %129 = vector.shape_cast %126 : vector<8x1xf32> to vector<1x8x1xf32>
      tpu.vector_store %arg13[%c2_69, %c0_70, %c0_71], %129 {strides = array<i32>} : memref<4x8x1xf32, #tpu.memory_space<vmem>>, vector<1x8x1xf32>,
      %c2_72 = arith.constant 2 : index
      %c0_73 = arith.constant 0 : index
      %c0_74 = arith.constant 0 : index
      %130 = vector.load %arg11[%c2_72, %c0_73, %c0_74] : memref<4x8x8xf32, #tpu.memory_space<vmem>>, vector<1x8x8xf32>
      %131 = vector.shape_cast %130 : vector<1x8x8xf32> to vector<8x8xf32>
      %132 = vector.broadcast %117 : vector<8x1xf32> to vector<8x8xf32>
      %133 = arith.mulf %132, %131 : vector<8x8xf32>
      %134 = arith.truncf %120 : vector<8x8xf32> to vector<8x8xbf16>
      %cst_75 = arith.constant dense<0.000000e+00> : vector<8x8xf32>
      %135 = tpu.matmul %134, %107, %cst_75 {dimension_numbers = #tpu.dot_dimension_numbers<[1], [0], [0], [1], [0, 0, 1, 1], [], []>} : vector<8x8xbf16>, vector<8x8xbf16>, vector<8x8xf32> -> vector<8x8xf32>
      %136 = arith.addf %133, %135 : vector<8x8xf32>
      %c2_76 = arith.constant 2 : index
      %c0_77 = arith.constant 0 : index
      %c0_78 = arith.constant 0 : index
      %137 = vector.load %arg11[%c2_76, %c0_77, %c0_78] : memref<4x8x8xf32, #tpu.memory_space<vmem>>, vector<1x8x8xf32>
      %138 = vector.shape_cast %137 : vector<1x8x8xf32> to vector<8x8xf32>
      %139 = vector.shape_cast %136 : vector<8x8xf32> to vector<1x8x8xf32>
      tpu.vector_store %arg11[%c2_76, %c0_77, %c0_78], %139 {strides = array<i32>} : memref<4x8x8xf32, #tpu.memory_space<vmem>>, vector<1x8x8xf32>,
      %c2_79 = arith.constant 2 : index
      %c0_80 = arith.constant 0 : index
      %c0_81 = arith.constant 0 : index
      %140 = vector.load %arg12[%c2_79, %c0_80, %c0_81] : memref<4x8x1xf32, #tpu.memory_space<vmem>>, vector<1x8x1xf32>
      %141 = vector.shape_cast %140 : vector<1x8x1xf32> to vector<8x1xf32>
      %142 = vector.shape_cast %115 : vector<8x1xf32> to vector<1x8x1xf32>
      tpu.vector_store %arg12[%c2_79, %c0_80, %c0_81], %142 {strides = array<i32>} : memref<4x8x1xf32, #tpu.memory_space<vmem>>, vector<1x8x1xf32>,
      %c0_82 = arith.constant 0 : index
      %c24 = arith.constant 24 : index
      %143 = vector.load %arg10[%c0_82, %c24] : memref<8x32xbf16, #tpu.memory_space<vmem>>, vector<8x8xbf16>
      %144 = vector.extract_strided_slice %20 {offsets = [0, 24], sizes = [8, 8], strides = [1, 1]} : vector<8x32xbf16> to vector<8x8xbf16>
      %145 = vector.extract_strided_slice %21 {offsets = [0, 24], sizes = [8, 8], strides = [1, 1]} : vector<8x32xbf16> to vector<8x8xbf16>
      %cst_83 = arith.constant dense<0.000000e+00> : vector<8x8xf32>
      %146 = tpu.matmul %143, %144, %cst_83 {dimension_numbers = #tpu.dot_dimension_numbers<[1], [1], [0], [0], [0, 0, 1, 0], [], []>} : vector<8x8xbf16>, vector<8x8xbf16>, vector<8x8xf32> -> vector<8x8xf32>
      %cst_84 = arith.constant -1.000000e+30 : f32
      %147 = vector.broadcast %cst_84 : f32 to vector<8x8xf32>
      %148 = arith.select %28, %146, %147 : vector<8x8xi1>, vector<8x8xf32>
      %c3 = arith.constant 3 : index
      %c0_85 = arith.constant 0 : index
      %c0_86 = arith.constant 0 : index
      %149 = vector.load %arg12[%c3, %c0_85, %c0_86] : memref<4x8x1xf32, #tpu.memory_space<vmem>>, vector<1x8x1xf32>
      %150 = vector.shape_cast %149 : vector<1x8x1xf32> to vector<8x1xf32>
      %cst_87 = arith.constant dense<0xFF800000> : vector<8xf32>
      %151 = vector.multi_reduction <maximumf>, %148, %cst_87 [1] : vector<8x8xf32> to vector<8xf32>
      %152 = vector.shape_cast %151 : vector<8xf32> to vector<8x1xf32>
      %153 = arith.maximumf %150, %152 : vector<8x1xf32>
      %154 = arith.subf %150, %153 : vector<8x1xf32>
      %155 = math.exp %154 : vector<8x1xf32>
      %156 = vector.broadcast %153 : vector<8x1xf32> to vector<8x8xf32>
      %157 = arith.subf %148, %156 : vector<8x8xf32>
      %158 = math.exp %157 : vector<8x8xf32>
      %c3_88 = arith.constant 3 : index
      %c0_89 = arith.constant 0 : index
      %c0_90 = arith.constant 0 : index
      %159 = vector.load %arg13[%c3_88, %c0_89, %c0_90] : memref<4x8x1xf32, #tpu.memory_space<vmem>>, vector<1x8x1xf32>
      %160 = vector.shape_cast %159 : vector<1x8x1xf32> to vector<8x1xf32>
      %161 = arith.mulf %155, %160 : vector<8x1xf32>
      %cst_91 = arith.constant dense<0.000000e+00> : vector<8xf32>
      %162 = vector.multi_reduction <add>, %158, %cst_91 [1] : vector<8x8xf32> to vector<8xf32>
      %163 = vector.shape_cast %162 : vector<8xf32> to vector<8x1xf32>
      %164 = arith.addf %161, %163 : vector<8x1xf32>
      %c3_92 = arith.constant 3 : index
      %c0_93 = arith.constant 0 : index
      %c0_94 = arith.constant 0 : index
      %165 = vector.load %arg13[%c3_92, %c0_93, %c0_94] : memref<4x8x1xf32, #tpu.memory_space<vmem>>, vector<1x8x1xf32>
      %166 = vector.shape_cast %165 : vector<1x8x1xf32> to vector<8x1xf32>
      %167 = vector.shape_cast %164 : vector<8x1xf32> to vector<1x8x1xf32>
      tpu.vector_store %arg13[%c3_92, %c0_93, %c0_94], %167 {strides = array<i32>} : memref<4x8x1xf32, #tpu.memory_space<vmem>>, vector<1x8x1xf32>,
      %c3_95 = arith.constant 3 : index
      %c0_96 = arith.constant 0 : index
      %c0_97 = arith.constant 0 : index
      %168 = vector.load %arg11[%c3_95, %c0_96, %c0_97] : memref<4x8x8xf32, #tpu.memory_space<vmem>>, vector<1x8x8xf32>
      %169 = vector.shape_cast %168 : vector<1x8x8xf32> to vector<8x8xf32>
      %170 = vector.broadcast %155 : vector<8x1xf32> to vector<8x8xf32>
      %171 = arith.mulf %170, %169 : vector<8x8xf32>
      %172 = arith.truncf %158 : vector<8x8xf32> to vector<8x8xbf16>
      %cst_98 = arith.constant dense<0.000000e+00> : vector<8x8xf32>
      %173 = tpu.matmul %172, %145, %cst_98 {dimension_numbers = #tpu.dot_dimension_numbers<[1], [0], [0], [1], [0, 0, 1, 1], [], []>} : vector<8x8xbf16>, vector<8x8xbf16>, vector<8x8xf32> -> vector<8x8xf32>
      %174 = arith.addf %171, %173 : vector<8x8xf32>
      %c3_99 = arith.constant 3 : index
      %c0_100 = arith.constant 0 : index
      %c0_101 = arith.constant 0 : index
      %175 = vector.load %arg11[%c3_99, %c0_100, %c0_101] : memref<4x8x8xf32, #tpu.memory_space<vmem>>, vector<1x8x8xf32>
      %176 = vector.shape_cast %175 : vector<1x8x8xf32> to vector<8x8xf32>
      %177 = vector.shape_cast %174 : vector<8x8xf32> to vector<1x8x8xf32>
      tpu.vector_store %arg11[%c3_99, %c0_100, %c0_101], %177 {strides = array<i32>} : memref<4x8x8xf32, #tpu.memory_space<vmem>>, vector<1x8x8xf32>,
      %c3_102 = arith.constant 3 : index
      %c0_103 = arith.constant 0 : index
      %c0_104 = arith.constant 0 : index
      %178 = vector.load %arg12[%c3_102, %c0_103, %c0_104] : memref<4x8x1xf32, #tpu.memory_space<vmem>>, vector<1x8x1xf32>
      %179 = vector.shape_cast %178 : vector<1x8x1xf32> to vector<8x1xf32>
      %180 = vector.shape_cast %153 : vector<8x1xf32> to vector<1x8x1xf32>
      tpu.vector_store %arg12[%c3_102, %c0_103, %c0_104], %180 {strides = array<i32>} : memref<4x8x1xf32, #tpu.memory_space<vmem>>, vector<1x8x1xf32>,
    } else {
    }
    %c0_i32_4 = arith.constant 0 : i32
    %9 = arith.cmpi eq, %arg2, %c0_i32_4 : i32
    %10 = arith.extui %9 : i1 to i32
    %c0_i32_5 = arith.constant 0 : i32
    %11 = arith.cmpi ne, %10, %c0_i32_5 : i32
    scf.if %11 {
      %cst = arith.constant 0.000000e+00 : f32
      %12 = vector.broadcast %cst : f32 to vector<8x32xf32>
      %c0 = arith.constant 0 : index
      %c0_6 = arith.constant 0 : index
      %c0_7 = arith.constant 0 : index
      %13 = vector.load %arg13[%c0, %c0_6, %c0_7] : memref<4x8x1xf32, #tpu.memory_space<vmem>>, vector<1x8x1xf32>
      %14 = vector.shape_cast %13 : vector<1x8x1xf32> to vector<8x1xf32>
      %15 = tpu.reciprocal %14 {approx = true} : vector<8x1xf32> -> vector<8x1xf32>
      %c0_8 = arith.constant 0 : index
      %c0_9 = arith.constant 0 : index
      %c0_10 = arith.constant 0 : index
      %16 = vector.load %arg11[%c0_8, %c0_9, %c0_10] : memref<4x8x8xf32, #tpu.memory_space<vmem>>, vector<1x8x8xf32>
      %17 = vector.shape_cast %16 : vector<1x8x8xf32> to vector<8x8xf32>
      %18 = vector.broadcast %15 : vector<8x1xf32> to vector<8x8xf32>
      %19 = arith.mulf %17, %18 : vector<8x8xf32>
      %20 = arith.truncf %19 : vector<8x8xf32> to vector<8x8xbf16>
      %c0_11 = arith.constant 0 : index
      %c0_12 = arith.constant 0 : index
      %21 = vector.load %arg7[%c0_11, %c0_12] : memref<32x32xbf16, #tpu.memory_space<vmem>>, vector<8x32xbf16>
      %cst_13 = arith.constant dense<0.000000e+00> : vector<8x32xf32>
      %22 = tpu.matmul %20, %21, %cst_13 {dimension_numbers = #tpu.dot_dimension_numbers<[1], [0], [0], [1], [0, 0, 1, 1], [], []>} : vector<8x8xbf16>, vector<8x32xbf16>, vector<8x32xf32> -> vector<8x32xf32>
      %23 = arith.addf %12, %22 : vector<8x32xf32>
      %c1 = arith.constant 1 : index
      %c0_14 = arith.constant 0 : index
      %c0_15 = arith.constant 0 : index
      %24 = vector.load %arg13[%c1, %c0_14, %c0_15] : memref<4x8x1xf32, #tpu.memory_space<vmem>>, vector<1x8x1xf32>
      %25 = vector.shape_cast %24 : vector<1x8x1xf32> to vector<8x1xf32>
      %26 = tpu.reciprocal %25 {approx = true} : vector<8x1xf32> -> vector<8x1xf32>
      %c1_16 = arith.constant 1 : index
      %c0_17 = arith.constant 0 : index
      %c0_18 = arith.constant 0 : index
      %27 = vector.load %arg11[%c1_16, %c0_17, %c0_18] : memref<4x8x8xf32, #tpu.memory_space<vmem>>, vector<1x8x8xf32>
      %28 = vector.shape_cast %27 : vector<1x8x8xf32> to vector<8x8xf32>
      %29 = vector.broadcast %26 : vector<8x1xf32> to vector<8x8xf32>
      %30 = arith.mulf %28, %29 : vector<8x8xf32>
      %31 = arith.truncf %30 : vector<8x8xf32> to vector<8x8xbf16>
      %c8 = arith.constant 8 : index
      %c0_19 = arith.constant 0 : index
      %32 = vector.load %arg7[%c8, %c0_19] : memref<32x32xbf16, #tpu.memory_space<vmem>>, vector<8x32xbf16>
      %cst_20 = arith.constant dense<0.000000e+00> : vector<8x32xf32>
      %33 = tpu.matmul %31, %32, %cst_20 {dimension_numbers = #tpu.dot_dimension_numbers<[1], [0], [0], [1], [0, 0, 1, 1], [], []>} : vector<8x8xbf16>, vector<8x32xbf16>, vector<8x32xf32> -> vector<8x32xf32>
      %34 = arith.addf %23, %33 : vector<8x32xf32>
      %c2 = arith.constant 2 : index
      %c0_21 = arith.constant 0 : index
      %c0_22 = arith.constant 0 : index
      %35 = vector.load %arg13[%c2, %c0_21, %c0_22] : memref<4x8x1xf32, #tpu.memory_space<vmem>>, vector<1x8x1xf32>
      %36 = vector.shape_cast %35 : vector<1x8x1xf32> to vector<8x1xf32>
      %37 = tpu.reciprocal %36 {approx = true} : vector<8x1xf32> -> vector<8x1xf32>
      %c2_23 = arith.constant 2 : index
      %c0_24 = arith.constant 0 : index
      %c0_25 = arith.constant 0 : index
      %38 = vector.load %arg11[%c2_23, %c0_24, %c0_25] : memref<4x8x8xf32, #tpu.memory_space<vmem>>, vector<1x8x8xf32>
      %39 = vector.shape_cast %38 : vector<1x8x8xf32> to vector<8x8xf32>
      %40 = vector.broadcast %37 : vector<8x1xf32> to vector<8x8xf32>
      %41 = arith.mulf %39, %40 : vector<8x8xf32>
      %42 = arith.truncf %41 : vector<8x8xf32> to vector<8x8xbf16>
      %c16 = arith.constant 16 : index
      %c0_26 = arith.constant 0 : index
      %43 = vector.load %arg7[%c16, %c0_26] : memref<32x32xbf16, #tpu.memory_space<vmem>>, vector<8x32xbf16>
      %cst_27 = arith.constant dense<0.000000e+00> : vector<8x32xf32>
      %44 = tpu.matmul %42, %43, %cst_27 {dimension_numbers = #tpu.dot_dimension_numbers<[1], [0], [0], [1], [0, 0, 1, 1], [], []>} : vector<8x8xbf16>, vector<8x32xbf16>, vector<8x32xf32> -> vector<8x32xf32>
      %45 = arith.addf %34, %44 : vector<8x32xf32>
      %c3 = arith.constant 3 : index
      %c0_28 = arith.constant 0 : index
      %c0_29 = arith.constant 0 : index
      %46 = vector.load %arg13[%c3, %c0_28, %c0_29] : memref<4x8x1xf32, #tpu.memory_space<vmem>>, vector<1x8x1xf32>
      %47 = vector.shape_cast %46 : vector<1x8x1xf32> to vector<8x1xf32>
      %48 = tpu.reciprocal %47 {approx = true} : vector<8x1xf32> -> vector<8x1xf32>
      %c3_30 = arith.constant 3 : index
      %c0_31 = arith.constant 0 : index
      %c0_32 = arith.constant 0 : index
      %49 = vector.load %arg11[%c3_30, %c0_31, %c0_32] : memref<4x8x8xf32, #tpu.memory_space<vmem>>, vector<1x8x8xf32>
      %50 = vector.shape_cast %49 : vector<1x8x8xf32> to vector<8x8xf32>
      %51 = vector.broadcast %48 : vector<8x1xf32> to vector<8x8xf32>
      %52 = arith.mulf %50, %51 : vector<8x8xf32>
      %53 = arith.truncf %52 : vector<8x8xf32> to vector<8x8xbf16>
      %c24 = arith.constant 24 : index
      %c0_33 = arith.constant 0 : index
      %54 = vector.load %arg7[%c24, %c0_33] : memref<32x32xbf16, #tpu.memory_space<vmem>>, vector<8x32xbf16>
      %cst_34 = arith.constant dense<0.000000e+00> : vector<8x32xf32>
      %55 = tpu.matmul %53, %54, %cst_34 {dimension_numbers = #tpu.dot_dimension_numbers<[1], [0], [0], [1], [0, 0, 1, 1], [], []>} : vector<8x8xbf16>, vector<8x32xbf16>, vector<8x32xf32> -> vector<8x32xf32>
      %56 = arith.addf %45, %55 : vector<8x32xf32>
      %c0_35 = arith.constant 0 : index
      %c0_36 = arith.constant 0 : index
      %57 = vector.load %arg8[%c0_35, %c0_36] : memref<1x32xf32, #tpu.memory_space<vmem>>, vector<1x32xf32>
      %58 = vector.broadcast %57 : vector<1x32xf32> to vector<8x32xf32>
      %59 = arith.addf %56, %58 : vector<8x32xf32>
      %c0_37 = arith.constant 0 : index
      %c0_38 = arith.constant 0 : index
      %c0_39 = arith.constant 0 : index
      %60 = vector.load %arg9[%c0_37, %c0_38, %c0_39] : memref<1x8x32xf32, #tpu.memory_space<vmem>>, vector<1x8x32xf32>
      %61 = vector.shape_cast %60 : vector<1x8x32xf32> to vector<8x32xf32>
      %62 = vector.shape_cast %59 : vector<8x32xf32> to vector<1x8x32xf32>
      tpu.vector_store %arg9[%c0_37, %c0_38, %c0_39], %62 {strides = array<i32>} : memref<1x8x32xf32, #tpu.memory_space<vmem>>, vector<1x8x32xf32>,
    } else {
    }
    return
  }
  func.func @transform_0(%arg0: i32, %arg1: i32, %arg2: i32) -> (i32, i32, i32) {
    %c0_i32 = arith.constant 0 : i32
    %c0_i32_0 = arith.constant 0 : i32
    return %arg0, %arg1, %c0_i32 : i32, i32, i32
  }
  func.func @transform_1(%arg0: i32, %arg1: i32, %arg2: i32) -> (i32, i32, i32) {
    %c0_i32 = arith.constant 0 : i32
    %c0_i32_0 = arith.constant 0 : i32
    return %arg0, %arg2, %c0_i32 : i32, i32, i32
  }
  func.func @transform_2(%arg0: i32, %arg1: i32, %arg2: i32) -> (i32, i32) {
    %c0_i32 = arith.constant 0 : i32
    %c0_i32_0 = arith.constant 0 : i32
    %c0_i32_1 = arith.constant 0 : i32
    return %c0_i32, %c0_i32_0 : i32, i32
  }
  func.func @transform_3(%arg0: i32, %arg1: i32, %arg2: i32) -> (i32, i32) {
    %c0_i32 = arith.constant 0 : i32
    %c0_i32_0 = arith.constant 0 : i32
    %c0_i32_1 = arith.constant 0 : i32
    return %c0_i32, %c0_i32_0 : i32, i32
  }
  func.func @transform_4(%arg0: i32, %arg1: i32, %arg2: i32) -> (i32, i32) {
    %c0_i32 = arith.constant 0 : i32
    %c0_i32_0 = arith.constant 0 : i32
    %c0_i32_1 = arith.constant 0 : i32
    return %c0_i32, %c0_i32_0 : i32, i32
  }
  func.func @transform_5(%arg0: i32, %arg1: i32, %arg2: i32) -> (i32, i32) {
    %c0_i32 = arith.constant 0 : i32
    %c0_i32_0 = arith.constant 0 : i32
    %c0_i32_1 = arith.constant 0 : i32
    return %c0_i32, %c0_i32_0 : i32, i32
  }
  func.func @transform_6(%arg0: i32, %arg1: i32, %arg2: i32) -> (i32, i32, i32) {
    %c0_i32 = arith.constant 0 : i32
    %c0_i32_0 = arith.constant 0 : i32
    return %arg0, %arg1, %c0_i32 : i32, i32, i32
  }
}

</mosaic_0001>

<llo_original>
// kernel: tpu_custom_call.1
$region0: #{tpu_custom_call.1}
  #allocation0 [shape = 'u32[]', space=smem, size = 0x4, offset = 0x4, fixed_abs, tag = 'smem constant byte address 0x4 - core index']
  #allocation1 [shape = 'u32[144,128]{1,0:T(1,128)}', space=vmem, size = 0x12000, scoped, tag = 'internal scratch']
  #allocation2 [shape = 'bf16[8,32]{1,0:T(8,128)(2,1)}', space=vmem, size = 0x800, scoped, tag = 'scratch operand']
  #allocation3 [shape = 'f32[4,8,8]{2,1,0:T(8,128)}', space=vmem, size = 0x4000, scoped, tag = 'scratch operand']
  #allocation4 [shape = 'f32[4,8,1]{2,1,0:T(8,128)}', space=vmem, size = 0x4000, scoped, tag = 'scratch operand']
  #allocation5 [shape = 'f32[4,8,1]{2,1,0:T(8,128)}', space=vmem, size = 0x4000, scoped, tag = 'scratch operand']
  %s0 = inlined_call_operand.hbm [shape: bf16[2,8,32], index: 0, kind: input, shape index: {}]
  %s1 = inlined_call_operand.hbm [shape: bf16[2,8,32], index: 1, kind: input, shape index: {}]
  %s2 = inlined_call_operand.hbm [shape: bf16[32,96], index: 2, kind: input, shape index: {}]
  %s3 = inlined_call_operand.vmem [shape: f32[1,96], index: 3, kind: input, shape index: {}]
  %s4 = inlined_call_operand.hbm [shape: bf16[32,32], index: 4, kind: input, shape index: {}]
  %s5 = inlined_call_operand.vmem [shape: f32[1,32], index: 5, kind: input, shape index: {}]
  %s6 = inlined_call_operand.hbm [shape: f32[2,8,32], index: 6, kind: output, shape index: {}]
  %s7 = sld [smem:[#allocation0]]
  $region85: #{tpu_custom_call.1} parent=0
    _
  %s9 = ssub.s32 1, %s7
  %s10 = scalar_select 0, %s9, %s7
  $region1: #{tpu_custom_call.1} parent=0
    #allocation6 [shape = 'u8[4096]{0}', space=vmem, size = 0x1000, scoped, tag = 'input window, operand 0']
    #allocation7 [shape = 's32[2]{0}', space=sflag, size = 0x8, scoped, tag = 'scoped memory for tpu_custom_call.1']
    #allocation8 [shape = 's32[2]{0}', space=sflag, size = 0x8, scoped, tag = 'scoped memory for tpu_custom_call.1']
    #allocation9 [shape = 'u8[4096]{0}', space=vmem, size = 0x1000, scoped, tag = 'input window, operand 1']
    #allocation10 [shape = 's32[2]{0}', space=sflag, size = 0x8, scoped, tag = 'scoped memory for tpu_custom_call.1']
    #allocation11 [shape = 'u8[8192]{0}', space=vmem, size = 0x2000, scoped, tag = 'input window, operand 2, single buffered']
    #allocation12 [shape = 'u8[8192]{0}', space=vmem, size = 0x2000, scoped, tag = 'input window, operand 4, single buffered']
    #allocation13 [shape = 's32[1]{0}', space=sflag, size = 0x4, scoped, tag = 'scoped memory for tpu_custom_call.1']
    #allocation14 [shape = 'u8[8192]{0}', space=vmem, size = 0x2000, scoped, tag = 'output window, operand 0']
    %11 = vsyncpa [#allocation7], 0
    %s12 = scalar_lea.sflag [#allocation7], 1
    %13 = vsyncpa %s12, 0
    %14 = vsyncpa [#allocation10], 0
    %s15 = scalar_lea.sflag [#allocation10], 1
    %16 = vsyncpa %s15, 0
    %17 = vsyncpa [#allocation13], 0
    %18 = vsyncpa [#allocation8], 0
    %s19 = scalar_lea.sflag [#allocation8], 1
    %20 = vsyncpa %s19, 0
    loop: start=0, step=1, limit=4
    $region2: #{tpu_custom_call.1} parent=1 // loop_pre_header
      _
    $region3: #{tpu_custom_call.1} parent=1 // loop_header
      %s22 = sphi 0, %s26
      %p23 = scmp.ge.s32.totalorder %s22, 4
      %s29 = sphi 0, %s48
      %s30 = sphi 0, %s44
      %s31 = sphi 0, %s40
      %s32 = sphi 0, %s29
      %s33 = sphi 0, %s30
      %s34 = sphi 0, %s31
      %s35 = sphi 0, %s32
      %s36 = sphi 0, %s33
      %s37 = sphi 0, %s34
      %s53 = sphi 0, %s55
      %s56 = sphi 0, %s53
      %s57 = sphi 0, %s56
      %s73 = sphi 0, %s57
      %s81 = sphi 0, %s83
      %s84 = sphi 0, %s81
      %s85 = sphi 0, %s84
      %s101 = sphi 0, %s85
      %s105 = sphi 0, %s105
      %s107 = sphi 0, %s105
      %s108 = sphi 0, %s107
      %s122 = sphi 0, %s108
      %s126 = sphi 0, %s126
      %s128 = sphi 0, %s126
      %s129 = sphi 0, %s128
      %s143 = sphi 0, %s129
      %s147 = sphi 0, %s147
      %s149 = sphi 0, %s147
      %s150 = sphi 0, %s149
      %s164 = sphi 0, %s150
      %s168 = sphi 0, %s168
      %s170 = sphi 0, %s168
      %s171 = sphi 0, %s170
      %s185 = sphi 0, %s171
      %s193 = sphi 0, %s195
      %s196 = sphi 0, %s193
      %s197 = sphi 0, %s196
      %s213 = sphi 0, %s197
    $region4: #{tpu_custom_call.1} parent=1 // loop_header_branch
      %25 = sbr.rel (%p23) target = $region8
    $region5: #{tpu_custom_call.1} parent=1 // loop_body
      %s27 = ssub.s32 %s22, 1
      %s28 = ssub.s32 %s22, 2
      %s38 = sadd.s32 1, %s31
      %p39 = scmp.ge.s32.totalorder %s38, 1
      %s40 = scalar_select %p39, 0, %s38
      %s41 = sadd.s32 1, %s30
      %s42 = scalar_select %p39, %s41, %s30
      %p43 = scmp.ge.s32.totalorder %s42, 1
      %s44 = scalar_select %p43, 0, %s42
      %s45 = sadd.s32 1, %s29
      %s46 = scalar_select %p43, %s45, %s29
      %p47 = scmp.ge.s32.totalorder %s46, 2
      %s48 = scalar_select %p47, 0, %s46
      %s49 = ssub.s32 %s29, %s48
      %s50 = ssub.s32 %s30, %s44
      %s51 = sor.u32 %s49, %s50
      %p52 = scmp.eq.s32.totalorder %s51, 0
      %s54 = sadd.s32 %s53, 1
      %s55 = scalar_select %p52, %s53, %s54
      %p58 = pneg %p52
      %p59 = scmp.eq.s32.totalorder %s22, 1
      %p60 = por %p58, %p59
      %p61 = scmp.ne.s32.totalorder %s53, %s56
      %p62 = scmp.eq.s32.totalorder %s22, 0
      %p63 = por %p61, %p62
      %p64 = scmp.ne.s32.totalorder %s53, %s56
      %p65 = scmp.eq.s32.totalorder %s27, 1
      %p66 = por %p64, %p65
      %p67 = scmp.ne.s32.totalorder %s56, %s57
      %p68 = scmp.eq.s32.totalorder %s27, 0
      %p69 = por %p67, %p68
      %p70 = scmp.ne.s32.totalorder %s56, %s57
      %p71 = scmp.eq.s32.totalorder %s28, 1
      %p72 = por %p70, %p71
      %p74 = scmp.ne.s32.totalorder %s57, %s73
      %p75 = scmp.eq.s32.totalorder %s28, 0
      %p76 = por %p74, %p75
      %s77 = ssub.s32 %s29, %s48
      %s78 = ssub.s32 %s31, %s40
      %s79 = sor.u32 %s77, %s78
      %p80 = scmp.eq.s32.totalorder %s79, 0
      %s82 = sadd.s32 %s81, 1
      %s83 = scalar_select %p80, %s81, %s82
      %p86 = pneg %p80
      %p87 = scmp.eq.s32.totalorder %s22, 1
      %p88 = por %p86, %p87
      %p89 = scmp.ne.s32.totalorder %s81, %s84
      %p90 = scmp.eq.s32.totalorder %s22, 0
      %p91 = por %p89, %p90
      %p92 = scmp.ne.s32.totalorder %s81, %s84
      %p93 = scmp.eq.s32.totalorder %s27, 1
      %p94 = por %p92, %p93
      %p95 = scmp.ne.s32.totalorder %s84, %s85
      %p96 = scmp.eq.s32.totalorder %s27, 0
      %p97 = por %p95, %p96
      %p98 = scmp.ne.s32.totalorder %s84, %s85
      %p99 = scmp.eq.s32.totalorder %s28, 1
      %p100 = por %p98, %p99
      %p102 = scmp.ne.s32.totalorder %s85, %s101
      %p103 = scmp.eq.s32.totalorder %s28, 0
      %p104 = por %p102, %p103
      %s106 = sadd.s32 %s105, 1
      %p109 = scmp.eq.s32.totalorder %s22, 1
      %p110 = scmp.ne.s32.totalorder %s105, %s107
      %p111 = scmp.eq.s32.totalorder %s22, 0
      %p112 = por %p110, %p111
      %p113 = scmp.ne.s32.totalorder %s105, %s107
      %p114 = scmp.eq.s32.totalorder %s27, 1
      %p115 = por %p113, %p114
      %p116 = scmp.ne.s32.totalorder %s107, %s108
      %p117 = scmp.eq.s32.totalorder %s27, 0
      %p118 = por %p116, %p117
      %p119 = scmp.ne.s32.totalorder %s107, %s108
      %p120 = scmp.eq.s32.totalorder %s28, 1
      %p121 = por %p119, %p120
      %p123 = scmp.ne.s32.totalorder %s108, %s122
      %p124 = scmp.eq.s32.totalorder %s28, 0
      %p125 = por %p123, %p124
      %s127 = sadd.s32 %s126, 1
      %p130 = scmp.eq.s32.totalorder %s22, 1
      %p131 = scmp.ne.s32.totalorder %s126, %s128
      %p132 = scmp.eq.s32.totalorder %s22, 0
      %p133 = por %p131, %p132
      %p134 = scmp.ne.s32.totalorder %s126, %s128
      %p135 = scmp.eq.s32.totalorder %s27, 1
      %p136 = por %p134, %p135
      %p137 = scmp.ne.s32.totalorder %s128, %s129
      %p138 = scmp.eq.s32.totalorder %s27, 0
      %p139 = por %p137, %p138
      %p140 = scmp.ne.s32.totalorder %s128, %s129
      %p141 = scmp.eq.s32.totalorder %s28, 1
      %p142 = por %p140, %p141
      %p144 = scmp.ne.s32.totalorder %s129, %s143
      %p145 = scmp.eq.s32.totalorder %s28, 0
      %p146 = por %p144, %p145
      %s148 = sadd.s32 %s147, 1
      %p151 = scmp.eq.s32.totalorder %s22, 1
      %p152 = scmp.ne.s32.totalorder %s147, %s149
      %p153 = scmp.eq.s32.totalorder %s22, 0
      %p154 = por %p152, %p153
      %p155 = scmp.ne.s32.totalorder %s147, %s149
      %p156 = scmp.eq.s32.totalorder %s27, 1
      %p157 = por %p155, %p156
      %p158 = scmp.ne.s32.totalorder %s149, %s150
      %p159 = scmp.eq.s32.totalorder %s27, 0
      %p160 = por %p158, %p159
      %p161 = scmp.ne.s32.totalorder %s149, %s150
      %p162 = scmp.eq.s32.totalorder %s28, 1
      %p163 = por %p161, %p162
      %p165 = scmp.ne.s32.totalorder %s150, %s164
      %p166 = scmp.eq.s32.totalorder %s28, 0
      %p167 = por %p165, %p166
      %s169 = sadd.s32 %s168, 1
      %p172 = scmp.eq.s32.totalorder %s22, 1
      %p173 = scmp.ne.s32.totalorder %s168, %s170
      %p174 = scmp.eq.s32.totalorder %s22, 0
      %p175 = por %p173, %p174
      %p176 = scmp.ne.s32.totalorder %s168, %s170
      %p177 = scmp.eq.s32.totalorder %s27, 1
      %p178 = por %p176, %p177
      %p179 = scmp.ne.s32.totalorder %s170, %s171
      %p180 = scmp.eq.s32.totalorder %s27, 0
      %p181 = por %p179, %p180
      %p182 = scmp.ne.s32.totalorder %s170, %s171
      %p183 = scmp.eq.s32.totalorder %s28, 1
      %p184 = por %p182, %p183
      %p186 = scmp.ne.s32.totalorder %s171, %s185
      %p187 = scmp.eq.s32.totalorder %s28, 0
      %p188 = por %p186, %p187
      %s189 = ssub.s32 %s29, %s48
      %s190 = ssub.s32 %s30, %s44
      %s191 = sor.u32 %s189, %s190
      %p192 = scmp.eq.s32.totalorder %s191, 0
      %s194 = sadd.s32 %s193, 1
      %s195 = scalar_select %p192, %s193, %s194
      %p198 = pneg %p192
      %p199 = scmp.eq.s32.totalorder %s22, 1
      %p200 = por %p198, %p199
      %p201 = scmp.ne.s32.totalorder %s193, %s196
      %p202 = scmp.eq.s32.totalorder %s22, 0
      %p203 = por %p201, %p202
      %p204 = scmp.ne.s32.totalorder %s193, %s196
      %p205 = scmp.eq.s32.totalorder %s27, 1
      %p206 = por %p204, %p205
      %p207 = scmp.ne.s32.totalorder %s196, %s197
      %p208 = scmp.eq.s32.totalorder %s27, 0
      %p209 = por %p207, %p208
      %p210 = scmp.ne.s32.totalorder %s196, %s197
      %p211 = scmp.eq.s32.totalorder %s28, 1
      %p212 = por %p210, %p211
      %p214 = scmp.ne.s32.totalorder %s197, %s213
      %p215 = scmp.eq.s32.totalorder %s28, 0
      %p216 = por %p214, %p215
      %p217 = scmp.le.s32.totalorder 1, %s22
      %p218 = scmp.lt.s32.totalorder %s22, 3
      %p219 = pnand %p217, %p218
      %p220 = pneg %p219
      // Predicated region
      $region9: #{tpu_custom_call.1} parent=5 // pred_check
        _
      $region10: #{tpu_custom_call.1} parent=5 // pred_check_branch
        %222 = sbr.rel (%p219) target = $region12
      $region11: #{tpu_custom_call.1} parent=5 // pred_region
        %s223 = ssub.s32 %s22, 1
        // Predicated region
        $region13: #{tpu_custom_call.1} parent=11 // pred_check
          %p224 = pneg %p118
        $region14: #{tpu_custom_call.1} parent=11 // pred_check_branch
          %226 = sbr.rel (%p224) target = $region16
        $region15: #{tpu_custom_call.1} parent=11 // pred_region
          %s228 = ssub.s32 256, 256
          %229 = vsyncadd [#allocation10], %s228
          %s230 = sshll.u32 [#allocation11], 4
          %s231 = int_to_ptr.vmem [resolvable:$true] %s230
          %236 = dma.hbm_to_vmem [thread:$0]  %s2, 256, %s231, [#allocation10], 64, 64, 4
        $region16: #{tpu_custom_call.1} parent=11 // pred_fallthru
          _
        // Predicated region
        $region17: #{tpu_custom_call.1} parent=11 // pred_check
          %p237 = pneg %p139
        $region18: #{tpu_custom_call.1} parent=11 // pred_check_branch
          %239 = sbr.rel (%p237) target = $region20
        $region19: #{tpu_custom_call.1} parent=11 // pred_region
          _
        $region20: #{tpu_custom_call.1} parent=11 // pred_fallthru
          _
        // Predicated region
        $region21: #{tpu_custom_call.1} parent=11 // pred_check
          %p240 = pneg %p160
        $region22: #{tpu_custom_call.1} parent=11 // pred_check_branch
          %242 = sbr.rel (%p240) target = $region24
        $region23: #{tpu_custom_call.1} parent=11 // pred_region
          %s244 = ssub.s32 256, 256
          %245 = vsyncadd [#allocation13], %s244
          %s246 = sshll.u32 [#allocation12], 4
          %s247 = int_to_ptr.vmem [resolvable:$true] %s246
          %252 = dma.hbm_to_vmem [thread:$0]  %s4, 256, %s247, [#allocation13], 64, 64, 4
        $region24: #{tpu_custom_call.1} parent=11 // pred_fallthru
          _
        // Predicated region
        $region25: #{tpu_custom_call.1} parent=11 // pred_check
          %p253 = pneg %p181
        $region26: #{tpu_custom_call.1} parent=11 // pred_check_branch
          %255 = sbr.rel (%p253) target = $region28
        $region27: #{tpu_custom_call.1} parent=11 // pred_region
          _
        $region28: #{tpu_custom_call.1} parent=11 // pred_fallthru
          _
      $region12: #{tpu_custom_call.1} parent=5 // pred_fallthru
        _
      %p256 = scmp.lt.s32.totalorder %s22, 2
      // Predicated region
      $region29: #{tpu_custom_call.1} parent=5 // pred_check
        %p257 = pneg %p256
      $region30: #{tpu_custom_call.1} parent=5 // pred_check_branch
        %259 = sbr.rel (%p257) target = $region32
      $region31: #{tpu_custom_call.1} parent=5 // pred_region
        // Predicated region
        $region33: #{tpu_custom_call.1} parent=31 // pred_check
          %p260 = pneg %p63
        $region34: #{tpu_custom_call.1} parent=31 // pred_check_branch
          %262 = sbr.rel (%p260) target = $region36
        $region35: #{tpu_custom_call.1} parent=31 // pred_region
          %s263 = sand.u32 %s53, 1
          %s264 = scalar_lea.sflag [#allocation7], %s263
          %s265 = sand.u32 %s53, 1
          %s266 = smul.addr %s265, 4
          %s267 = scalar_lea.vmem [#allocation6], %s266
          %s269 = ssub.s32 64, 64
          %270 = vsyncadd %s264, %s269
          %s271 = sadd.s32 %s30, %s29
          %s272 = smul.addr %s271, 64
          %s273 = scalar_lea.hbm %s0, %s272
          %s275 = sshll.u32 %s267, 4
          %s276 = int_to_ptr.vmem [resolvable:$true] %s275
          %278 = dma.hbm_to_vmem [thread:$0]  %s273, 64, %s276, %s264
        $region36: #{tpu_custom_call.1} parent=31 // pred_fallthru
          _
        // Predicated region
        $region37: #{tpu_custom_call.1} parent=31 // pred_check
          %p279 = pneg %p91
        $region38: #{tpu_custom_call.1} parent=31 // pred_check_branch
          %281 = sbr.rel (%p279) target = $region40
        $region39: #{tpu_custom_call.1} parent=31 // pred_region
          %s282 = sand.u32 %s22, 1
          %s283 = scalar_lea.sflag [#allocation10], %s282
          %s284 = sand.u32 %s81, 1
          %s285 = smul.addr %s284, 4
          %s286 = scalar_lea.vmem [#allocation9], %s285
          %s288 = ssub.s32 64, 64
          %289 = vsyncadd %s283, %s288
          %s290 = sadd.s32 %s31, %s29
          %s291 = smul.addr %s290, 64
          %s292 = scalar_lea.hbm %s1, %s291
          %s294 = sshll.u32 %s286, 4
          %s295 = int_to_ptr.vmem [resolvable:$true] %s294
          %297 = dma.hbm_to_vmem [thread:$0]  %s292, 64, %s295, %s283
        $region40: #{tpu_custom_call.1} parent=31 // pred_fallthru
          _
      $region32: #{tpu_custom_call.1} parent=5 // pred_fallthru
        _
      %p298 = scmp.le.s32.totalorder 1, %s22
      %p299 = scmp.lt.s32.totalorder %s22, 3
      %p300 = pnand %p298, %p299
      %p301 = pneg %p300
      // Predicated region
      $region41: #{tpu_custom_call.1} parent=5 // pred_check
        _
      $region42: #{tpu_custom_call.1} parent=5 // pred_check_branch
        %303 = sbr.rel (%p300) target = $region44
      $region43: #{tpu_custom_call.1} parent=5 // pred_region
        %s304 = ssub.s32 %s22, 1
        %s305 = sand.u32 %s56, 1
        %s306 = scalar_lea.sflag [#allocation7], %s305
        %s307 = sand.u32 %s56, 1
        %s308 = smul.addr %s307, 4
        %s309 = scalar_lea.vmem [#allocation6], %s308
        // Predicated region
        $region45: #{tpu_custom_call.1} parent=43 // pred_check
          %p310 = pneg %p69
        $region46: #{tpu_custom_call.1} parent=43 // pred_check_branch
          %312 = sbr.rel (%p310) target = $region48
        $region47: #{tpu_custom_call.1} parent=43 // pred_region
          %313 = dma.done %s306, 64
        $region48: #{tpu_custom_call.1} parent=43 // pred_fallthru
          _
        %s314 = sand.u32 %s27, 1
        %s315 = scalar_lea.sflag [#allocation10], %s314
        %s316 = sand.u32 %s84, 1
        %s317 = smul.addr %s316, 4
        %s318 = scalar_lea.vmem [#allocation9], %s317
        // Predicated region
        $region49: #{tpu_custom_call.1} parent=43 // pred_check
          %p319 = pneg %p97
        $region50: #{tpu_custom_call.1} parent=43 // pred_check_branch
          %321 = sbr.rel (%p319) target = $region52
        $region51: #{tpu_custom_call.1} parent=43 // pred_region
          %322 = dma.done %s315, 64
        $region52: #{tpu_custom_call.1} parent=43 // pred_fallthru
          _
        // Predicated region
        $region53: #{tpu_custom_call.1} parent=43 // pred_check
          %p323 = pneg %p118
        $region54: #{tpu_custom_call.1} parent=43 // pred_check_branch
          %325 = sbr.rel (%p323) target = $region56
        $region55: #{tpu_custom_call.1} parent=43 // pred_region
          %326 = dma.done [#allocation10], 256
        $region56: #{tpu_custom_call.1} parent=43 // pred_fallthru
          _
        // Predicated region
        $region57: #{tpu_custom_call.1} parent=43 // pred_check
          %p327 = pneg %p160
        $region58: #{tpu_custom_call.1} parent=43 // pred_check_branch
          %329 = sbr.rel (%p327) target = $region60
        $region59: #{tpu_custom_call.1} parent=43 // pred_region
          %330 = dma.done [#allocation13], 256
        $region60: #{tpu_custom_call.1} parent=43 // pred_fallthru
          _
        %s331 = sand.u32 %s56, 1
        %s332 = scalar_lea.sflag [#allocation7], %s331
        %s333 = sand.u32 %s56, 1
        %s334 = smul.addr %s333, 4
        %s335 = scalar_lea.vmem [#allocation6], %s334
        %p336 = pneg %p69
        %p337 = pneg %p66
        %s338 = sand.u32 %s27, 1
        %s339 = scalar_lea.sflag [#allocation10], %s338
        %s340 = sand.u32 %s84, 1
        %s341 = smul.addr %s340, 4
        %s342 = scalar_lea.vmem [#allocation9], %s341
        %p343 = pneg %p97
        %p344 = pneg %p94
        %p345 = pneg %p118
        %p346 = pneg %p115
        %p347 = pneg %p139
        %p348 = pneg %p136
        %p349 = pneg %p160
        %p350 = pneg %p157
        %p351 = pneg %p181
        %p352 = pneg %p178
        %p353 = pneg %p209
        %p354 = pneg %p206
        %s355 = sand.u32 %s196, 1
        %s356 = scalar_lea.sflag [#allocation8], %s355
        %s357 = sand.u32 %s196, 1
        %s358 = smul.addr %s357, 8
        %s359 = scalar_lea.vmem [#allocation14], %s358
        %s361 = smul.u32 %s33, 8
        %s362 = smul.u32 %s34, 8
        %p363 = scmp.eq.s32.totalorder %s34, 0
        // Predicated region
        $region61: #{tpu_custom_call.1} parent=43 // pred_check
          %p364 = pneg %p363
        $region62: #{tpu_custom_call.1} parent=43 // pred_check_branch
          %366 = sbr.rel (%p364) target = $region64
        $region63: #{tpu_custom_call.1} parent=43 // pred_region
          %v367 = vld [vmem:[%s309] sm:$0xf]
          %v368 = vld [vmem:[#allocation11] sm:$0xf]
          %v369 = vld [vmem:[#allocation11 + $0x4] sm:$0xf]
          %v370 = vld [vmem:[#allocation11 + $0x8] sm:$0xf]
          %v371 = vld [vmem:[#allocation11 + $0xc] sm:$0xf]
          %v372 = vld [vmem:[%s3] sm:$0x1]
          %v374 = vlaneseq
          %v375 = vshrl.u32 %v374, 7
          %v376 = vsub.s32 0, %v375
          %v377 = vrot.slane %v372, %v376
          %v383 = vunpack.c.l.b16 %v368
          %v384 = vunpack.c.l.b16 %v369
          %v385 = vunpack.c.l.b16 %v370
          %v386 = vunpack.c.l.b16 %v371
          %v387 = vpack.c.b16 %v384, %v383
          %v388 = vpack.c.b16 %v386, %v385
          %vm391 = vcmask 261120
          %v393 = vsel %vm391, %v367, 0
          %395 = vmatprep.subr.bf16.mxu0 0
          %396 = vmatpush1.bf16.msra.mxu0 %v387
          %397 = vmatprep.subr.bf16.mxu0 0
          %398 = vmatpush1.bf16.msra.mxu0 %v388
          %399 = vmatprep.subr.bf16.mxu0 0
          %400 = vmatpush1.bf16.msra.mxu0 0
          %401 = vmatprep.subr.bf16.mxu0 0
          %402 = vmatpush1.bf16.msra.mxu0 0
          %403 = vmatprep.subr.bf16.mxu0 0
          %404 = vmatpush1.bf16.msra.mxu0 0
          %405 = vmatprep.subr.bf16.mxu0 0
          %406 = vmatpush1.bf16.msra.mxu0 0
          %407 = vmatprep.subr.bf16.mxu0 0
          %408 = vmatpush1.bf16.msra.mxu0 0
          %409 = vmatprep.subr.bf16.mxu0 0
          %410 = vmatpush1.bf16.msra.mxu0 0
          %411 = vmatprep.subr.bf16.mxu0 0
          %412 = vmatpush1.bf16.msra.mxu0 0
          %413 = vmatprep.subr.bf16.mxu0 0
          %414 = vmatpush1.bf16.msra.mxu0 0
          %415 = vmatprep.subr.bf16.mxu0 0
          %416 = vmatpush1.bf16.msra.mxu0 0
          %417 = vmatprep.subr.bf16.mxu0 0
          %418 = vmatpush1.bf16.msra.mxu0 0
          %419 = vmatprep.subr.bf16.mxu0 0
          %420 = vmatpush1.bf16.msra.mxu0 0
          %421 = vmatprep.subr.bf16.mxu0 0
          %422 = vmatpush1.bf16.msra.mxu0 0
          %423 = vmatprep.subr.bf16.mxu0 0
          %424 = vmatpush1.bf16.msra.mxu0 0
          %425 = vmatprep.subr.bf16.mxu0 0
          %426 = vmatpush1.bf16.msra.mxu0 0
          %427 = vmatprep.mubr.bf16.mxu0 0
          %428 = vmatmul.mubr.bf16.gmra.mrb[0].mxu0 %v393
          %v429 = vpop.f32.mrb[0].mxu0
          %v430 = vadd.f32 %v377, %v429
          %v431 = vpop.f32.mrb[0].mxu0
          %v432 = vpop.f32.mrb[0].mxu0
          %v433 = vpop.f32.mrb[0].mxu0
          %434 = vdwg.mxu0
          %v435 = vmul.f32 %v430, 0.35355338
          %v436 = vpack.c.bf16 %v435, %v435
          %vm437 = vcmask 257024
          %438 = vst.msk [vmem:[#allocation2] sm:$0xf] %vm437, %v436
          %vm439 = vcmask 7168
          %440 = vst.msk [vmem:[#allocation4] sm:$0xff] %vm439, -1e+30
          %441 = vst.msk [vmem:[#allocation4 + $0x8] sm:$0xff] %vm439, -1e+30
          %442 = vst.msk [vmem:[#allocation4 + $0x10] sm:$0xff] %vm439, -1e+30
          %443 = vst.msk [vmem:[#allocation4 + $0x18] sm:$0xff] %vm439, -1e+30
          %444 = vst.msk [vmem:[#allocation5] sm:$0xff] %vm439, 0.0
          %445 = vst.msk [vmem:[#allocation5 + $0x8] sm:$0xff] %vm439, 0.0
          %446 = vst.msk [vmem:[#allocation5 + $0x10] sm:$0xff] %vm439, 0.0
          %447 = vst.msk [vmem:[#allocation5 + $0x18] sm:$0xff] %vm439, 0.0
          %vm448 = vcmask 64512
          %449 = vst.msk [vmem:[#allocation3] sm:$0xff] %vm448, 0.0
          %450 = vst.msk [vmem:[#allocation3 + $0x8] sm:$0xff] %vm448, 0.0
          %451 = vst.msk [vmem:[#allocation3 + $0x10] sm:$0xff] %vm448, 0.0
          %452 = vst.msk [vmem:[#allocation3 + $0x18] sm:$0xff] %vm448, 0.0
        $region64: #{tpu_custom_call.1} parent=43 // pred_fallthru
          _
        %s453 = sadd.s32 %s361, 8
        %p454 = scmp.lt.s32.totalorder %s362, %s453
        // Predicated region
        $region65: #{tpu_custom_call.1} parent=43 // pred_check
          %p455 = pneg %p454
        $region66: #{tpu_custom_call.1} parent=43 // pred_check_branch
          %457 = sbr.rel (%p455) target = $region68
        $region67: #{tpu_custom_call.1} parent=43 // pred_region
          %v458 = vld [vmem:[%s318] sm:$0xf]
          %v459 = vld [vmem:[#allocation11] sm:$0xf]
          %v460 = vld [vmem:[#allocation11 + $0x4] sm:$0xf]
          %v461 = vld [vmem:[#allocation11 + $0x8] sm:$0xf]
          %v462 = vld [vmem:[#allocation11 + $0xc] sm:$0xf]
          %v463 = vld [vmem:[%s3] sm:$0x1]
          %v465 = vlaneseq
          %v466 = vshrl.u32 %v465, 7
          %v467 = vsub.s32 0, %v466
          %v468 = vrot.slane %v463, %v467
          %v473 = vunpack.c.l.b16 %v459
          %v474 = vunpack.c.l.b16 %v460
          %v475 = vunpack.c.l.b16 %v461
          %v476 = vunpack.c.l.b16 %v462
          %v477 = vpack.c.b16 %v474, %v473
          %v478 = vpack.c.b16 %v476, %v475
          %479 = vrot.lane.b32.xlu0 %v477, 96
          %v480 = vpop.permute.xlu0 %479
          %481 = vrot.lane.b32.xlu0 %v478, 96
          %v482 = vpop.permute.xlu0 %481
          %485 = vrot.lane.b32.xlu0 %v468, 96
          %v486 = vpop.permute.xlu0 %485
          %vm488 = vcmask 261120
          %v490 = vsel %vm488, %v458, 0
          %492 = vmatprep.subr.bf16.mxu0 0
          %493 = vmatpush1.bf16.msra.mxu0 %v480
          %494 = vmatprep.subr.bf16.mxu0 0
          %495 = vmatpush1.bf16.msra.mxu0 %v482
          %496 = vmatprep.subr.bf16.mxu0 0
          %497 = vmatpush1.bf16.msra.mxu0 0
          %498 = vmatprep.subr.bf16.mxu0 0
          %499 = vmatpush1.bf16.msra.mxu0 0
          %500 = vmatprep.subr.bf16.mxu0 0
          %501 = vmatpush1.bf16.msra.mxu0 0
          %502 = vmatprep.subr.bf16.mxu0 0
          %503 = vmatpush1.bf16.msra.mxu0 0
          %504 = vmatprep.subr.bf16.mxu0 0
          %505 = vmatpush1.bf16.msra.mxu0 0
          %506 = vmatprep.subr.bf16.mxu0 0
          %507 = vmatpush1.bf16.msra.mxu0 0
          %508 = vmatprep.subr.bf16.mxu0 0
          %509 = vmatpush1.bf16.msra.mxu0 0
          %510 = vmatprep.subr.bf16.mxu0 0
          %511 = vmatpush1.bf16.msra.mxu0 0
          %512 = vmatprep.subr.bf16.mxu0 0
          %513 = vmatpush1.bf16.msra.mxu0 0
          %514 = vmatprep.subr.bf16.mxu0 0
          %515 = vmatpush1.bf16.msra.mxu0 0
          %516 = vmatprep.subr.bf16.mxu0 0
          %517 = vmatpush1.bf16.msra.mxu0 0
          %518 = vmatprep.subr.bf16.mxu0 0
          %519 = vmatpush1.bf16.msra.mxu0 0
          %520 = vmatprep.subr.bf16.mxu0 0
          %521 = vmatpush1.bf16.msra.mxu0 0
          %522 = vmatprep.subr.bf16.mxu0 0
          %523 = vmatpush1.bf16.msra.mxu0 0
          %524 = vmatprep.mubr.bf16.mxu0 0
          %525 = vmatmul.mubr.bf16.gmra.mrb[0].mxu0 %v490
          %v526 = vpop.f32.mrb[0].mxu0
          %v527 = vadd.f32 %v486, %v526
          %v528 = vpop.f32.mrb[0].mxu0
          %v529 = vpop.f32.mrb[0].mxu0
          %v530 = vpop.f32.mrb[0].mxu0
          %531 = vdwg.mxu0
          %v532 = vpack.c.bf16 %v527, %v527
          %v533 = vlaneseq
          %v534 = vshrl.u32 %v533, 7
          %v535 = vstv %s361
          %v536 = vadd.s32 %v535, %v534
          %v537 = vlaneseq
          %v538 = vand.u32 %v537, 127
          %v539 = vstv %s362
          %v540 = vadd.s32 %v539, %v538
          %vm541 = vcmp.le.s32.totalorder %v540, %v536
          %v542 = vld [vmem:[#allocation2] sm:$0xf]
          %vm543 = vcmask 64512
          %v545 = vsel %vm543, %v542, 0
          %v548 = vsel %vm543, %v532, 0
          %550 = vmatprep.subr.bf16.mxu0 0
          %551 = vmatpush1.bf16.xpose.msra.mxu0 %v548
          %552 = vmatprep.subr.bf16.mxu0 0
          %553 = vmatpush1.bf16.xpose.msra.mxu0 0
          %554 = vmatprep.subr.bf16.mxu0 0
          %555 = vmatpush1.bf16.xpose.msra.mxu0 0
          %556 = vmatprep.subr.bf16.mxu0 0
          %557 = vmatpush1.bf16.xpose.msra.mxu0 0
          %558 = vmatprep.subr.bf16.mxu0 0
          %559 = vmatpush1.bf16.xpose.msra.mxu0 0
          %560 = vmatprep.subr.bf16.mxu0 0
          %561 = vmatpush1.bf16.xpose.msra.mxu0 0
          %562 = vmatprep.subr.bf16.mxu0 0
          %563 = vmatpush1.bf16.xpose.msra.mxu0 0
          %564 = vmatprep.subr.bf16.mxu0 0
          %565 = vmatpush1.bf16.xpose.msra.mxu0 0
          %566 = vmatprep.subr.bf16.mxu0 0
          %567 = vmatpush1.bf16.xpose.msra.mxu0 0
          %568 = vmatprep.subr.bf16.mxu0 0
          %569 = vmatpush1.bf16.xpose.msra.mxu0 0
          %570 = vmatprep.subr.bf16.mxu0 0
          %571 = vmatpush1.bf16.xpose.msra.mxu0 0
          %572 = vmatprep.subr.bf16.mxu0 0
          %573 = vmatpush1.bf16.xpose.msra.mxu0 0
          %574 = vmatprep.subr.bf16.mxu0 0
          %575 = vmatpush1.bf16.xpose.msra.mxu0 0
          %576 = vmatprep.subr.bf16.mxu0 0
          %577 = vmatpush1.bf16.xpose.msra.mxu0 0
          %578 = vmatprep.subr.bf16.mxu0 0
          %579 = vmatpush1.bf16.xpose.msra.mxu0 0
          %580 = vmatprep.subr.bf16.mxu0 0
          %581 = vmatpush1.bf16.xpose.msra.mxu0 0
          %582 = vmatprep.mubr.bf16.mxu0 0
          %583 = vmatmul.mubr.bf16.gmra.mrb[0].mxu0 %v545
          %v584 = vpop.f32.mrb[0].mxu0
          %v585 = vadd.f32 0.0, %v584
          %v586 = vpop.f32.mrb[0].mxu0
          %v587 = vpop.f32.mrb[0].mxu0
          %v588 = vpop.f32.mrb[0].mxu0
          %589 = vdwg.mxu0
          %v590 = vsel %vm541, %v585, -1e+30
          %v591 = vld [vmem:[#allocation4] sm:$0xff]
          %v592 = vsel %vm543, %v590, -inf
          %593 = vmax.xlane.f32.xlu0 %v592
          %v594 = vpop.xlane.xlu0 %593
          %v595 = vmax.f32 %v591, %v594
          %v596 = vsub.f32 %v591, %v595
          %v597 = vmul.f32 %v596, 1.442695
          %v598 = vpow.pop %v597
          %600 = vset.pattern.permute.xlu0 0
          %601 = vperm.xlu0 %600, %v595
          %v602 = vpop.permute.xlu0 %601
          %v604 = vsub.f32 %v590, %v602
          %v605 = vmul.f32 %v604, 1.442695
          %v606 = vpow.pop %v605
          %v607 = vld [vmem:[#allocation5] sm:$0xff]
          %v608 = vmul.f32 %v598, %v607
          %v609 = vsel %vm543, %v606, 0.0
          %610 = vadd.xlane.f32.xlu0 %v609
          %v611 = vpop.xlane.xlu0 %610
          %v612 = vadd.f32 %v608, %v611
          %vm613 = vcmask 7168
          %614 = vst.msk [vmem:[#allocation5] sm:$0xff] %vm613, %v612
          %v615 = vld [vmem:[#allocation3] sm:$0xff]
          %617 = vset.pattern.permute.xlu0 0
          %618 = vperm.xlu0 %617, %v598
          %v619 = vpop.permute.xlu0 %618
          %v621 = vmul.f32 %v619, %v615
          %v622 = vpack.c.bf16 %v606, %v606
          %624 = vrot.lane.b32.xlu0 %v532, 96
          %v625 = vpop.permute.xlu0 %624
          %v627 = vsel %vm543, %v622, 0
          %vm629 = vcmask 1043456
          %v631 = vsel %vm629, %v625, 0
          %633 = vmatprep.subr.bf16.mxu0 0
          %634 = vmatpush1.bf16.msra.mxu0 %v631
          %635 = vmatprep.subr.bf16.mxu0 0
          %636 = vmatpush1.bf16.msra.mxu0 0
          %637 = vmatprep.subr.bf16.mxu0 0
          %638 = vmatpush1.bf16.msra.mxu0 0
          %639 = vmatprep.subr.bf16.mxu0 0
          %640 = vmatpush1.bf16.msra.mxu0 0
          %641 = vmatprep.subr.bf16.mxu0 0
          %642 = vmatpush1.bf16.msra.mxu0 0
          %643 = vmatprep.subr.bf16.mxu0 0
          %644 = vmatpush1.bf16.msra.mxu0 0
          %645 = vmatprep.subr.bf16.mxu0 0
          %646 = vmatpush1.bf16.msra.mxu0 0
          %647 = vmatprep.subr.bf16.mxu0 0
          %648 = vmatpush1.bf16.msra.mxu0 0
          %649 = vmatprep.subr.bf16.mxu0 0
          %650 = vmatpush1.bf16.msra.mxu0 0
          %651 = vmatprep.subr.bf16.mxu0 0
          %652 = vmatpush1.bf16.msra.mxu0 0
          %653 = vmatprep.subr.bf16.mxu0 0
          %654 = vmatpush1.bf16.msra.mxu0 0
          %655 = vmatprep.subr.bf16.mxu0 0
          %656 = vmatpush1.bf16.msra.mxu0 0
          %657 = vmatprep.subr.bf16.mxu0 0
          %658 = vmatpush1.bf16.msra.mxu0 0
          %659 = vmatprep.subr.bf16.mxu0 0
          %660 = vmatpush1.bf16.msra.mxu0 0
          %661 = vmatprep.subr.bf16.mxu0 0
          %662 = vmatpush1.bf16.msra.mxu0 0
          %663 = vmatprep.subr.bf16.mxu0 0
          %664 = vmatpush1.bf16.msra.mxu0 0
          %665 = vmatprep.mubr.bf16.mxu0 0
          %666 = vmatmul.mubr.bf16.gmra.mrb[0].mxu0 %v627
          %v667 = vpop.f32.mrb[0].mxu0
          %v668 = vadd.f32 0.0, %v667
          %v669 = vpop.f32.mrb[0].mxu0
          %v670 = vpop.f32.mrb[0].mxu0
          %v671 = vpop.f32.mrb[0].mxu0
          %672 = vdwg.mxu0
          %v673 = vadd.f32 %v621, %v668
          %674 = vst.msk [vmem:[#allocation3] sm:$0xff] %vm543, %v673
          %675 = vst.msk [vmem:[#allocation4] sm:$0xff] %vm613, %v595
          %v676 = vld [vmem:[#allocation2] sm:$0xf]
          %v678 = vunpack.c.l.b16 %v676
          %v679 = vpack.c.b16 %v678, %v678
          %680 = vrot.lane.b32.xlu0 %v679, 120
          %v681 = vpop.permute.xlu0 %680
          %682 = vrot.lane.b32.xlu0 %v532, 120
          %v683 = vpop.permute.xlu0 %682
          %v685 = vsel %vm543, %v681, 0
          %v688 = vsel %vm543, %v683, 0
          %690 = vmatprep.subr.bf16.mxu0 0
          %691 = vmatpush1.bf16.xpose.msra.mxu0 %v688
          %692 = vmatprep.subr.bf16.mxu0 0
          %693 = vmatpush1.bf16.xpose.msra.mxu0 0
          %694 = vmatprep.subr.bf16.mxu0 0
          %695 = vmatpush1.bf16.xpose.msra.mxu0 0
          %696 = vmatprep.subr.bf16.mxu0 0
          %697 = vmatpush1.bf16.xpose.msra.mxu0 0
          %698 = vmatprep.subr.bf16.mxu0 0
          %699 = vmatpush1.bf16.xpose.msra.mxu0 0
          %700 = vmatprep.subr.bf16.mxu0 0
          %701 = vmatpush1.bf16.xpose.msra.mxu0 0
          %702 = vmatprep.subr.bf16.mxu0 0
          %703 = vmatpush1.bf16.xpose.msra.mxu0 0
          %704 = vmatprep.subr.bf16.mxu0 0
          %705 = vmatpush1.bf16.xpose.msra.mxu0 0
          %706 = vmatprep.subr.bf16.mxu0 0
          %707 = vmatpush1.bf16.xpose.msra.mxu0 0
          %708 = vmatprep.subr.bf16.mxu0 0
          %709 = vmatpush1.bf16.xpose.msra.mxu0 0
          %710 = vmatprep.subr.bf16.mxu0 0
          %711 = vmatpush1.bf16.xpose.msra.mxu0 0
          %712 = vmatprep.subr.bf16.mxu0 0
          %713 = vmatpush1.bf16.xpose.msra.mxu0 0
          %714 = vmatprep.subr.bf16.mxu0 0
          %715 = vmatpush1.bf16.xpose.msra.mxu0 0
          %716 = vmatprep.subr.bf16.mxu0 0
          %717 = vmatpush1.bf16.xpose.msra.mxu0 0
          %718 = vmatprep.subr.bf16.mxu0 0
          %719 = vmatpush1.bf16.xpose.msra.mxu0 0
          %720 = vmatprep.subr.bf16.mxu0 0
          %721 = vmatpush1.bf16.xpose.msra.mxu0 0
          %722 = vmatprep.mubr.bf16.mxu0 0
          %723 = vmatmul.mubr.bf16.gmra.mrb[0].mxu0 %v685
          %v724 = vpop.f32.mrb[0].mxu0
          %v725 = vadd.f32 0.0, %v724
          %v726 = vpop.f32.mrb[0].mxu0
          %v727 = vpop.f32.mrb[0].mxu0
          %v728 = vpop.f32.mrb[0].mxu0
          %729 = vdwg.mxu0
          %v730 = vsel %vm541, %v725, -1e+30
          %s731 = scalar_lea.vmem [#allocation4], 8
          %v732 = vld [vmem:[%s731] sm:$0xff]
          %v733 = vsel %vm543, %v730, -inf
          %734 = vmax.xlane.f32.xlu0 %v733
          %v735 = vpop.xlane.xlu0 %734
          %v736 = vmax.f32 %v732, %v735
          %v737 = vsub.f32 %v732, %v736
          %v738 = vmul.f32 %v737, 1.442695
          %v739 = vpow.pop %v738
          %741 = vset.pattern.permute.xlu0 0
          %742 = vperm.xlu0 %741, %v736
          %v743 = vpop.permute.xlu0 %742
          %v745 = vsub.f32 %v730, %v743
          %v746 = vmul.f32 %v745, 1.442695
          %v747 = vpow.pop %v746
          %s748 = scalar_lea.vmem [#allocation5], 8
          %v749 = vld [vmem:[%s748] sm:$0xff]
          %v750 = vmul.f32 %v739, %v749
          %v751 = vsel %vm543, %v747, 0.0
          %752 = vadd.xlane.f32.xlu0 %v751
          %v753 = vpop.xlane.xlu0 %752
          %v754 = vadd.f32 %v750, %v753
          %755 = vst.msk [vmem:[%s748] sm:$0xff] %vm613, %v754
          %s756 = scalar_lea.vmem [#allocation3], 8
          %v757 = vld [vmem:[%s756] sm:$0xff]
          %759 = vset.pattern.permute.xlu0 0
          %760 = vperm.xlu0 %759, %v739
          %v761 = vpop.permute.xlu0 %760
          %v763 = vmul.f32 %v761, %v757
          %v764 = vpack.c.bf16 %v747, %v747
          %765 = vrot.lane.b32.xlu0 %v532, 88
          %v766 = vpop.permute.xlu0 %765
          %v768 = vsel %vm543, %v764, 0
          %v771 = vsel %vm629, %v766, 0
          %773 = vmatprep.subr.bf16.mxu0 0
          %774 = vmatpush1.bf16.msra.mxu0 %v771
          %775 = vmatprep.subr.bf16.mxu0 0
          %776 = vmatpush1.bf16.msra.mxu0 0
          %777 = vmatprep.subr.bf16.mxu0 0
          %778 = vmatpush1.bf16.msra.mxu0 0
          %779 = vmatprep.subr.bf16.mxu0 0
          %780 = vmatpush1.bf16.msra.mxu0 0
          %781 = vmatprep.subr.bf16.mxu0 0
          %782 = vmatpush1.bf16.msra.mxu0 0
          %783 = vmatprep.subr.bf16.mxu0 0
          %784 = vmatpush1.bf16.msra.mxu0 0
          %785 = vmatprep.subr.bf16.mxu0 0
          %786 = vmatpush1.bf16.msra.mxu0 0
          %787 = vmatprep.subr.bf16.mxu0 0
          %788 = vmatpush1.bf16.msra.mxu0 0
          %789 = vmatprep.subr.bf16.mxu0 0
          %790 = vmatpush1.bf16.msra.mxu0 0
          %791 = vmatprep.subr.bf16.mxu0 0
          %792 = vmatpush1.bf16.msra.mxu0 0
          %793 = vmatprep.subr.bf16.mxu0 0
          %794 = vmatpush1.bf16.msra.mxu0 0
          %795 = vmatprep.subr.bf16.mxu0 0
          %796 = vmatpush1.bf16.msra.mxu0 0
          %797 = vmatprep.subr.bf16.mxu0 0
          %798 = vmatpush1.bf16.msra.mxu0 0
          %799 = vmatprep.subr.bf16.mxu0 0
          %800 = vmatpush1.bf16.msra.mxu0 0
          %801 = vmatprep.subr.bf16.mxu0 0
          %802 = vmatpush1.bf16.msra.mxu0 0
          %803 = vmatprep.subr.bf16.mxu0 0
          %804 = vmatpush1.bf16.msra.mxu0 0
          %805 = vmatprep.mubr.bf16.mxu0 0
          %806 = vmatmul.mubr.bf16.gmra.mrb[0].mxu0 %v768
          %v807 = vpop.f32.mrb[0].mxu0
          %v808 = vadd.f32 0.0, %v807
          %v809 = vpop.f32.mrb[0].mxu0
          %v810 = vpop.f32.mrb[0].mxu0
          %v811 = vpop.f32.mrb[0].mxu0
          %812 = vdwg.mxu0
          %v813 = vadd.f32 %v763, %v808
          %814 = vst.msk [vmem:[%s756] sm:$0xff] %vm543, %v813
          %815 = vst.msk [vmem:[%s731] sm:$0xff] %vm613, %v736
          %v816 = vld [vmem:[#allocation2] sm:$0xf]
          %v818 = vunpack.c.l.b16 %v816
          %v819 = vpack.c.b16 %v818, %v818
          %820 = vrot.lane.b32.xlu0 %v819, 112
          %v821 = vpop.permute.xlu0 %820
          %822 = vrot.lane.b32.xlu0 %v532, 112
          %v823 = vpop.permute.xlu0 %822
          %v825 = vsel %vm543, %v821, 0
          %v828 = vsel %vm543, %v823, 0
          %830 = vmatprep.subr.bf16.mxu0 0
          %831 = vmatpush1.bf16.xpose.msra.mxu0 %v828
          %832 = vmatprep.subr.bf16.mxu0 0
          %833 = vmatpush1.bf16.xpose.msra.mxu0 0
          %834 = vmatprep.subr.bf16.mxu0 0
          %835 = vmatpush1.bf16.xpose.msra.mxu0 0
          %836 = vmatprep.subr.bf16.mxu0 0
          %837 = vmatpush1.bf16.xpose.msra.mxu0 0
          %838 = vmatprep.subr.bf16.mxu0 0
          %839 = vmatpush1.bf16.xpose.msra.mxu0 0
          %840 = vmatprep.subr.bf16.mxu0 0
          %841 = vmatpush1.bf16.xpose.msra.mxu0 0
          %842 = vmatprep.subr.bf16.mxu0 0
          %843 = vmatpush1.bf16.xpose.msra.mxu0 0
          %844 = vmatprep.subr.bf16.mxu0 0
          %845 = vmatpush1.bf16.xpose.msra.mxu0 0
          %846 = vmatprep.subr.bf16.mxu0 0
          %847 = vmatpush1.bf16.xpose.msra.mxu0 0
          %848 = vmatprep.subr.bf16.mxu0 0
          %849 = vmatpush1.bf16.xpose.msra.mxu0 0
          %850 = vmatprep.subr.bf16.mxu0 0
          %851 = vmatpush1.bf16.xpose.msra.mxu0 0
          %852 = vmatprep.subr.bf16.mxu0 0
          %853 = vmatpush1.bf16.xpose.msra.mxu0 0
          %854 = vmatprep.subr.bf16.mxu0 0
          %855 = vmatpush1.bf16.xpose.msra.mxu0 0
          %856 = vmatprep.subr.bf16.mxu0 0
          %857 = vmatpush1.bf16.xpose.msra.mxu0 0
          %858 = vmatprep.subr.bf16.mxu0 0
          %859 = vmatpush1.bf16.xpose.msra.mxu0 0
          %860 = vmatprep.subr.bf16.mxu0 0
          %861 = vmatpush1.bf16.xpose.msra.mxu0 0
          %862 = vmatprep.mubr.bf16.mxu0 0
          %863 = vmatmul.mubr.bf16.gmra.mrb[0].mxu0 %v825
          %v864 = vpop.f32.mrb[0].mxu0
          %v865 = vadd.f32 0.0, %v864
          %v866 = vpop.f32.mrb[0].mxu0
          %v867 = vpop.f32.mrb[0].mxu0
          %v868 = vpop.f32.mrb[0].mxu0
          %869 = vdwg.mxu0
          %v870 = vsel %vm541, %v865, -1e+30
          %s871 = scalar_lea.vmem [#allocation4], 16
          %v872 = vld [vmem:[%s871] sm:$0xff]
          %v873 = vsel %vm543, %v870, -inf
          %874 = vmax.xlane.f32.xlu0 %v873
          %v875 = vpop.xlane.xlu0 %874
          %v876 = vmax.f32 %v872, %v875
          %v877 = vsub.f32 %v872, %v876
          %v878 = vmul.f32 %v877, 1.442695
          %v879 = vpow.pop %v878
          %881 = vset.pattern.permute.xlu0 0
          %882 = vperm.xlu0 %881, %v876
          %v883 = vpop.permute.xlu0 %882
          %v885 = vsub.f32 %v870, %v883
          %v886 = vmul.f32 %v885, 1.442695
          %v887 = vpow.pop %v886
          %s888 = scalar_lea.vmem [#allocation5], 16
          %v889 = vld [vmem:[%s888] sm:$0xff]
          %v890 = vmul.f32 %v879, %v889
          %v891 = vsel %vm543, %v887, 0.0
          %892 = vadd.xlane.f32.xlu0 %v891
          %v893 = vpop.xlane.xlu0 %892
          %v894 = vadd.f32 %v890, %v893
          %895 = vst.msk [vmem:[%s888] sm:$0xff] %vm613, %v894
          %s896 = scalar_lea.vmem [#allocation3], 16
          %v897 = vld [vmem:[%s896] sm:$0xff]
          %899 = vset.pattern.permute.xlu0 0
          %900 = vperm.xlu0 %899, %v879
          %v901 = vpop.permute.xlu0 %900
          %v903 = vmul.f32 %v901, %v897
          %v904 = vpack.c.bf16 %v887, %v887
          %905 = vrot.lane.b32.xlu0 %v532, 80
          %v906 = vpop.permute.xlu0 %905
          %v908 = vsel %vm543, %v904, 0
          %v911 = vsel %vm629, %v906, 0
          %913 = vmatprep.subr.bf16.mxu0 0
          %914 = vmatpush1.bf16.msra.mxu0 %v911
          %915 = vmatprep.subr.bf16.mxu0 0
          %916 = vmatpush1.bf16.msra.mxu0 0
          %917 = vmatprep.subr.bf16.mxu0 0
          %918 = vmatpush1.bf16.msra.mxu0 0
          %919 = vmatprep.subr.bf16.mxu0 0
          %920 = vmatpush1.bf16.msra.mxu0 0
          %921 = vmatprep.subr.bf16.mxu0 0
          %922 = vmatpush1.bf16.msra.mxu0 0
          %923 = vmatprep.subr.bf16.mxu0 0
          %924 = vmatpush1.bf16.msra.mxu0 0
          %925 = vmatprep.subr.bf16.mxu0 0
          %926 = vmatpush1.bf16.msra.mxu0 0
          %927 = vmatprep.subr.bf16.mxu0 0
          %928 = vmatpush1.bf16.msra.mxu0 0
          %929 = vmatprep.subr.bf16.mxu0 0
          %930 = vmatpush1.bf16.msra.mxu0 0
          %931 = vmatprep.subr.bf16.mxu0 0
          %932 = vmatpush1.bf16.msra.mxu0 0
          %933 = vmatprep.subr.bf16.mxu0 0
          %934 = vmatpush1.bf16.msra.mxu0 0
          %935 = vmatprep.subr.bf16.mxu0 0
          %936 = vmatpush1.bf16.msra.mxu0 0
          %937 = vmatprep.subr.bf16.mxu0 0
          %938 = vmatpush1.bf16.msra.mxu0 0
          %939 = vmatprep.subr.bf16.mxu0 0
          %940 = vmatpush1.bf16.msra.mxu0 0
          %941 = vmatprep.subr.bf16.mxu0 0
          %942 = vmatpush1.bf16.msra.mxu0 0
          %943 = vmatprep.subr.bf16.mxu0 0
          %944 = vmatpush1.bf16.msra.mxu0 0
          %945 = vmatprep.mubr.bf16.mxu0 0
          %946 = vmatmul.mubr.bf16.gmra.mrb[0].mxu0 %v908
          %v947 = vpop.f32.mrb[0].mxu0
          %v948 = vadd.f32 0.0, %v947
          %v949 = vpop.f32.mrb[0].mxu0
          %v950 = vpop.f32.mrb[0].mxu0
          %v951 = vpop.f32.mrb[0].mxu0
          %952 = vdwg.mxu0
          %v953 = vadd.f32 %v903, %v948
          %954 = vst.msk [vmem:[%s896] sm:$0xff] %vm543, %v953
          %955 = vst.msk [vmem:[%s871] sm:$0xff] %vm613, %v876
          %v956 = vld [vmem:[#allocation2] sm:$0xf]
          %v958 = vunpack.c.l.b16 %v956
          %v959 = vpack.c.b16 %v958, %v958
          %960 = vrot.lane.b32.xlu0 %v959, 104
          %v961 = vpop.permute.xlu0 %960
          %962 = vrot.lane.b32.xlu0 %v532, 104
          %v963 = vpop.permute.xlu0 %962
          %v965 = vsel %vm543, %v961, 0
          %v968 = vsel %vm543, %v963, 0
          %970 = vmatprep.subr.bf16.mxu0 0
          %971 = vmatpush1.bf16.xpose.msra.mxu0 %v968
          %972 = vmatprep.subr.bf16.mxu0 0
          %973 = vmatpush1.bf16.xpose.msra.mxu0 0
          %974 = vmatprep.subr.bf16.mxu0 0
          %975 = vmatpush1.bf16.xpose.msra.mxu0 0
          %976 = vmatprep.subr.bf16.mxu0 0
          %977 = vmatpush1.bf16.xpose.msra.mxu0 0
          %978 = vmatprep.subr.bf16.mxu0 0
          %979 = vmatpush1.bf16.xpose.msra.mxu0 0
          %980 = vmatprep.subr.bf16.mxu0 0
          %981 = vmatpush1.bf16.xpose.msra.mxu0 0
          %982 = vmatprep.subr.bf16.mxu0 0
          %983 = vmatpush1.bf16.xpose.msra.mxu0 0
          %984 = vmatprep.subr.bf16.mxu0 0
          %985 = vmatpush1.bf16.xpose.msra.mxu0 0
          %986 = vmatprep.subr.bf16.mxu0 0
          %987 = vmatpush1.bf16.xpose.msra.mxu0 0
          %988 = vmatprep.subr.bf16.mxu0 0
          %989 = vmatpush1.bf16.xpose.msra.mxu0 0
          %990 = vmatprep.subr.bf16.mxu0 0
          %991 = vmatpush1.bf16.xpose.msra.mxu0 0
          %992 = vmatprep.subr.bf16.mxu0 0
          %993 = vmatpush1.bf16.xpose.msra.mxu0 0
          %994 = vmatprep.subr.bf16.mxu0 0
          %995 = vmatpush1.bf16.xpose.msra.mxu0 0
          %996 = vmatprep.subr.bf16.mxu0 0
          %997 = vmatpush1.bf16.xpose.msra.mxu0 0
          %998 = vmatprep.subr.bf16.mxu0 0
          %999 = vmatpush1.bf16.xpose.msra.mxu0 0
          %1000 = vmatprep.subr.bf16.mxu0 0
          %1001 = vmatpush1.bf16.xpose.msra.mxu0 0
          %1002 = vmatprep.mubr.bf16.mxu0 0
          %1003 = vmatmul.mubr.bf16.gmra.mrb[0].mxu0 %v965
          %v1004 = vpop.f32.mrb[0].mxu0
          %v1005 = vadd.f32 0.0, %v1004
          %v1006 = vpop.f32.mrb[0].mxu0
          %v1007 = vpop.f32.mrb[0].mxu0
          %v1008 = vpop.f32.mrb[0].mxu0
          %1009 = vdwg.mxu0
          %v1010 = vsel %vm541, %v1005, -1e+30
          %s1011 = scalar_lea.vmem [#allocation4], 24
          %v1012 = vld [vmem:[%s1011] sm:$0xff]
          %v1013 = vsel %vm543, %v1010, -inf
          %1014 = vmax.xlane.f32.xlu0 %v1013
          %v1015 = vpop.xlane.xlu0 %1014
          %v1016 = vmax.f32 %v1012, %v1015
          %v1017 = vsub.f32 %v1012, %v1016
          %v1018 = vmul.f32 %v1017, 1.442695
          %v1019 = vpow.pop %v1018
          %1021 = vset.pattern.permute.xlu0 0
          %1022 = vperm.xlu0 %1021, %v1016
          %v1023 = vpop.permute.xlu0 %1022
          %v1025 = vsub.f32 %v1010, %v1023
          %v1026 = vmul.f32 %v1025, 1.442695
          %v1027 = vpow.pop %v1026
          %s1028 = scalar_lea.vmem [#allocation5], 24
          %v1029 = vld [vmem:[%s1028] sm:$0xff]
          %v1030 = vmul.f32 %v1019, %v1029
          %v1031 = vsel %vm543, %v1027, 0.0
          %1032 = vadd.xlane.f32.xlu0 %v1031
          %v1033 = vpop.xlane.xlu0 %1032
          %v1034 = vadd.f32 %v1030, %v1033
          %1035 = vst.msk [vmem:[%s1028] sm:$0xff] %vm613, %v1034
          %s1036 = scalar_lea.vmem [#allocation3], 24
          %v1037 = vld [vmem:[%s1036] sm:$0xff]
          %1039 = vset.pattern.permute.xlu0 0
          %1040 = vperm.xlu0 %1039, %v1019
          %v1041 = vpop.permute.xlu0 %1040
          %v1043 = vmul.f32 %v1041, %v1037
          %v1044 = vpack.c.bf16 %v1027, %v1027
          %1045 = vrot.lane.b32.xlu0 %v532, 72
          %v1046 = vpop.permute.xlu0 %1045
          %v1048 = vsel %vm543, %v1044, 0
          %v1051 = vsel %vm629, %v1046, 0
          %1053 = vmatprep.subr.bf16.mxu0 0
          %1054 = vmatpush1.bf16.msra.mxu0 %v1051
          %1055 = vmatprep.subr.bf16.mxu0 0
          %1056 = vmatpush1.bf16.msra.mxu0 0
          %1057 = vmatprep.subr.bf16.mxu0 0
          %1058 = vmatpush1.bf16.msra.mxu0 0
          %1059 = vmatprep.subr.bf16.mxu0 0
          %1060 = vmatpush1.bf16.msra.mxu0 0
          %1061 = vmatprep.subr.bf16.mxu0 0
          %1062 = vmatpush1.bf16.msra.mxu0 0
          %1063 = vmatprep.subr.bf16.mxu0 0
          %1064 = vmatpush1.bf16.msra.mxu0 0
          %1065 = vmatprep.subr.bf16.mxu0 0
          %1066 = vmatpush1.bf16.msra.mxu0 0
          %1067 = vmatprep.subr.bf16.mxu0 0
          %1068 = vmatpush1.bf16.msra.mxu0 0
          %1069 = vmatprep.subr.bf16.mxu0 0
          %1070 = vmatpush1.bf16.msra.mxu0 0
          %1071 = vmatprep.subr.bf16.mxu0 0
          %1072 = vmatpush1.bf16.msra.mxu0 0
          %1073 = vmatprep.subr.bf16.mxu0 0
          %1074 = vmatpush1.bf16.msra.mxu0 0
          %1075 = vmatprep.subr.bf16.mxu0 0
          %1076 = vmatpush1.bf16.msra.mxu0 0
          %1077 = vmatprep.subr.bf16.mxu0 0
          %1078 = vmatpush1.bf16.msra.mxu0 0
          %1079 = vmatprep.subr.bf16.mxu0 0
          %1080 = vmatpush1.bf16.msra.mxu0 0
          %1081 = vmatprep.subr.bf16.mxu0 0
          %1082 = vmatpush1.bf16.msra.mxu0 0
          %1083 = vmatprep.subr.bf16.mxu0 0
          %1084 = vmatpush1.bf16.msra.mxu0 0
          %1085 = vmatprep.mubr.bf16.mxu0 0
          %1086 = vmatmul.mubr.bf16.gmra.mrb[0].mxu0 %v1048
          %v1087 = vpop.f32.mrb[0].mxu0
          %v1088 = vadd.f32 0.0, %v1087
          %v1089 = vpop.f32.mrb[0].mxu0
          %v1090 = vpop.f32.mrb[0].mxu0
          %v1091 = vpop.f32.mrb[0].mxu0
          %1092 = vdwg.mxu0
          %v1093 = vadd.f32 %v1043, %v1088
          %1094 = vst.msk [vmem:[%s1036] sm:$0xff] %vm543, %v1093
          %1095 = vst.msk [vmem:[%s1011] sm:$0xff] %vm613, %v1016
        $region68: #{tpu_custom_call.1} parent=43 // pred_fallthru
          _
        // Predicated region
        $region69: #{tpu_custom_call.1} parent=43 // pred_check
          %p1096 = pneg %p363
        $region70: #{tpu_custom_call.1} parent=43 // pred_check_branch
          %1098 = sbr.rel (%p1096) target = $region72
        $region71: #{tpu_custom_call.1} parent=43 // pred_region
          %v1099 = vld [vmem:[#allocation5] sm:$0xff]
          %v1100 = vrcp.pop %v1099
          %v1101 = vld [vmem:[#allocation3] sm:$0xff]
          %1103 = vset.pattern.permute.xlu0 0
          %1104 = vperm.xlu0 %1103, %v1100
          %v1105 = vpop.permute.xlu0 %1104
          %v1107 = vmul.f32 %v1101, %v1105
          %v1108 = vpack.c.bf16 %v1107, %v1107
          %v1109 = vld [vmem:[#allocation12] sm:$0xf]
          %s1110 = scalar_lea.vmem [#allocation5], 8
          %v1111 = vld [vmem:[%s1110] sm:$0xff]
          %v1112 = vrcp.pop %v1111
          %s1113 = scalar_lea.vmem [#allocation3], 8
          %v1114 = vld [vmem:[%s1113] sm:$0xff]
          %1116 = vset.pattern.permute.xlu0 0
          %1117 = vperm.xlu0 %1116, %v1112
          %v1118 = vpop.permute.xlu0 %1117
          %v1120 = vmul.f32 %v1114, %v1118
          %v1121 = vpack.c.bf16 %v1120, %v1120
          %v1122 = vld [vmem:[#allocation12 + $0x4] sm:$0xf]
          %vm1123 = vcmask 64512
          %v1125 = vsel %vm1123, %v1121, 0
          %vm1127 = vcmask 1043456
          %v1129 = vsel %vm1127, %v1122, 0
          %1131 = vmatprep.subr.bf16.mxu0 0
          %1132 = vmatpush1.bf16.msra.mxu0 %v1129
          %1133 = vmatprep.subr.bf16.mxu0 0
          %1134 = vmatpush1.bf16.msra.mxu0 0
          %1135 = vmatprep.subr.bf16.mxu0 0
          %1136 = vmatpush1.bf16.msra.mxu0 0
          %1137 = vmatprep.subr.bf16.mxu0 0
          %1138 = vmatpush1.bf16.msra.mxu0 0
          %1139 = vmatprep.subr.bf16.mxu0 0
          %1140 = vmatpush1.bf16.msra.mxu0 0
          %1141 = vmatprep.subr.bf16.mxu0 0
          %1142 = vmatpush1.bf16.msra.mxu0 0
          %1143 = vmatprep.subr.bf16.mxu0 0
          %1144 = vmatpush1.bf16.msra.mxu0 0
          %1145 = vmatprep.subr.bf16.mxu0 0
          %1146 = vmatpush1.bf16.msra.mxu0 0
          %1147 = vmatprep.subr.bf16.mxu0 0
          %1148 = vmatpush1.bf16.msra.mxu0 0
          %1149 = vmatprep.subr.bf16.mxu0 0
          %1150 = vmatpush1.bf16.msra.mxu0 0
          %1151 = vmatprep.subr.bf16.mxu0 0
          %1152 = vmatpush1.bf16.msra.mxu0 0
          %1153 = vmatprep.subr.bf16.mxu0 0
          %1154 = vmatpush1.bf16.msra.mxu0 0
          %1155 = vmatprep.subr.bf16.mxu0 0
          %1156 = vmatpush1.bf16.msra.mxu0 0
          %1157 = vmatprep.subr.bf16.mxu0 0
          %1158 = vmatpush1.bf16.msra.mxu0 0
          %1159 = vmatprep.subr.bf16.mxu0 0
          %1160 = vmatpush1.bf16.msra.mxu0 0
          %1161 = vmatprep.subr.bf16.mxu0 0
          %1162 = vmatpush1.bf16.msra.mxu0 0
          %1163 = vmatprep.mubr.bf16.mxu0 0
          %1164 = vmatmul.mubr.bf16.gmra.mrb[0].mxu0 %v1125
          %v1165 = vpop.f32.mrb[0].mxu0
          %v1166 = vadd.f32 0.0, %v1165
          %v1167 = vpop.f32.mrb[0].mxu0
          %v1168 = vpop.f32.mrb[0].mxu0
          %v1169 = vpop.f32.mrb[0].mxu0
          %1170 = vdwg.mxu0
          %v1172 = vsel %vm1123, %v1108, 0
          %v1175 = vsel %vm1127, %v1109, 0
          %1177 = vmatprep.subr.bf16.mxu0 0
          %1178 = vmatpush1.bf16.msra.mxu0 %v1175
          %1179 = vmatprep.subr.bf16.mxu0 0
          %1180 = vmatpush1.bf16.msra.mxu0 0
          %1181 = vmatprep.subr.bf16.mxu0 0
          %1182 = vmatpush1.bf16.msra.mxu0 0
          %1183 = vmatprep.subr.bf16.mxu0 0
          %1184 = vmatpush1.bf16.msra.mxu0 0
          %1185 = vmatprep.subr.bf16.mxu0 0
          %1186 = vmatpush1.bf16.msra.mxu0 0
          %1187 = vmatprep.subr.bf16.mxu0 0
          %1188 = vmatpush1.bf16.msra.mxu0 0
          %1189 = vmatprep.subr.bf16.mxu0 0
          %1190 = vmatpush1.bf16.msra.mxu0 0
          %1191 = vmatprep.subr.bf16.mxu0 0
          %1192 = vmatpush1.bf16.msra.mxu0 0
          %1193 = vmatprep.subr.bf16.mxu0 0
          %1194 = vmatpush1.bf16.msra.mxu0 0
          %1195 = vmatprep.subr.bf16.mxu0 0
          %1196 = vmatpush1.bf16.msra.mxu0 0
          %1197 = vmatprep.subr.bf16.mxu0 0
          %1198 = vmatpush1.bf16.msra.mxu0 0
          %1199 = vmatprep.subr.bf16.mxu0 0
          %1200 = vmatpush1.bf16.msra.mxu0 0
          %1201 = vmatprep.subr.bf16.mxu0 0
          %1202 = vmatpush1.bf16.msra.mxu0 0
          %1203 = vmatprep.subr.bf16.mxu0 0
          %1204 = vmatpush1.bf16.msra.mxu0 0
          %1205 = vmatprep.subr.bf16.mxu0 0
          %1206 = vmatpush1.bf16.msra.mxu0 0
          %1207 = vmatprep.subr.bf16.mxu0 0
          %1208 = vmatpush1.bf16.msra.mxu0 0
          %1209 = vmatprep.mubr.bf16.mxu0 0
          %1210 = vmatmul.mubr.bf16.gmra.mrb[0].mxu0 %v1172
          %v1211 = vpop.f32.mrb[0].mxu0
          %v1212 = vadd.f32 %v1166, %v1211
          %v1213 = vpop.f32.mrb[0].mxu0
          %v1214 = vpop.f32.mrb[0].mxu0
          %v1215 = vpop.f32.mrb[0].mxu0
          %1216 = vdwg.mxu0
          %s1217 = scalar_lea.vmem [#allocation5], 16
          %v1218 = vld [vmem:[%s1217] sm:$0xff]
          %v1219 = vrcp.pop %v1218
          %s1220 = scalar_lea.vmem [#allocation3], 16
          %v1221 = vld [vmem:[%s1220] sm:$0xff]
          %1223 = vset.pattern.permute.xlu0 0
          %1224 = vperm.xlu0 %1223, %v1219
          %v1225 = vpop.permute.xlu0 %1224
          %v1227 = vmul.f32 %v1221, %v1225
          %v1228 = vpack.c.bf16 %v1227, %v1227
          %v1229 = vld [vmem:[#allocation12 + $0x8] sm:$0xf]
          %v1231 = vsel %vm1123, %v1228, 0
          %v1234 = vsel %vm1127, %v1229, 0
          %1236 = vmatprep.subr.bf16.mxu0 0
          %1237 = vmatpush1.bf16.msra.mxu0 %v1234
          %1238 = vmatprep.subr.bf16.mxu0 0
          %1239 = vmatpush1.bf16.msra.mxu0 0
          %1240 = vmatprep.subr.bf16.mxu0 0
          %1241 = vmatpush1.bf16.msra.mxu0 0
          %1242 = vmatprep.subr.bf16.mxu0 0
          %1243 = vmatpush1.bf16.msra.mxu0 0
          %1244 = vmatprep.subr.bf16.mxu0 0
          %1245 = vmatpush1.bf16.msra.mxu0 0
          %1246 = vmatprep.subr.bf16.mxu0 0
          %1247 = vmatpush1.bf16.msra.mxu0 0
          %1248 = vmatprep.subr.bf16.mxu0 0
          %1249 = vmatpush1.bf16.msra.mxu0 0
          %1250 = vmatprep.subr.bf16.mxu0 0
          %1251 = vmatpush1.bf16.msra.mxu0 0
          %1252 = vmatprep.subr.bf16.mxu0 0
          %1253 = vmatpush1.bf16.msra.mxu0 0
          %1254 = vmatprep.subr.bf16.mxu0 0
          %1255 = vmatpush1.bf16.msra.mxu0 0
          %1256 = vmatprep.subr.bf16.mxu0 0
          %1257 = vmatpush1.bf16.msra.mxu0 0
          %1258 = vmatprep.subr.bf16.mxu0 0
          %1259 = vmatpush1.bf16.msra.mxu0 0
          %1260 = vmatprep.subr.bf16.mxu0 0
          %1261 = vmatpush1.bf16.msra.mxu0 0
          %1262 = vmatprep.subr.bf16.mxu0 0
          %1263 = vmatpush1.bf16.msra.mxu0 0
          %1264 = vmatprep.subr.bf16.mxu0 0
          %1265 = vmatpush1.bf16.msra.mxu0 0
          %1266 = vmatprep.subr.bf16.mxu0 0
          %1267 = vmatpush1.bf16.msra.mxu0 0
          %1268 = vmatprep.mubr.bf16.mxu0 0
          %1269 = vmatmul.mubr.bf16.gmra.mrb[0].mxu0 %v1231
          %v1270 = vpop.f32.mrb[0].mxu0
          %v1271 = vadd.f32 0.0, %v1270
          %v1272 = vpop.f32.mrb[0].mxu0
          %v1273 = vpop.f32.mrb[0].mxu0
          %v1274 = vpop.f32.mrb[0].mxu0
          %1275 = vdwg.mxu0
          %v1276 = vadd.f32 %v1212, %v1271
          %s1277 = scalar_lea.vmem [#allocation5], 24
          %v1278 = vld [vmem:[%s1277] sm:$0xff]
          %v1279 = vrcp.pop %v1278
          %s1280 = scalar_lea.vmem [#allocation3], 24
          %v1281 = vld [vmem:[%s1280] sm:$0xff]
          %1283 = vset.pattern.permute.xlu0 0
          %1284 = vperm.xlu0 %1283, %v1279
          %v1285 = vpop.permute.xlu0 %1284
          %v1287 = vmul.f32 %v1281, %v1285
          %v1288 = vpack.c.bf16 %v1287, %v1287
          %v1289 = vld [vmem:[#allocation12 + $0xc] sm:$0xf]
          %v1291 = vsel %vm1123, %v1288, 0
          %v1294 = vsel %vm1127, %v1289, 0
          %1296 = vmatprep.subr.bf16.mxu0 0
          %1297 = vmatpush1.bf16.msra.mxu0 %v1294
          %1298 = vmatprep.subr.bf16.mxu0 0
          %1299 = vmatpush1.bf16.msra.mxu0 0
          %1300 = vmatprep.subr.bf16.mxu0 0
          %1301 = vmatpush1.bf16.msra.mxu0 0
          %1302 = vmatprep.subr.bf16.mxu0 0
          %1303 = vmatpush1.bf16.msra.mxu0 0
          %1304 = vmatprep.subr.bf16.mxu0 0
          %1305 = vmatpush1.bf16.msra.mxu0 0
          %1306 = vmatprep.subr.bf16.mxu0 0
          %1307 = vmatpush1.bf16.msra.mxu0 0
          %1308 = vmatprep.subr.bf16.mxu0 0
          %1309 = vmatpush1.bf16.msra.mxu0 0
          %1310 = vmatprep.subr.bf16.mxu0 0
          %1311 = vmatpush1.bf16.msra.mxu0 0
          %1312 = vmatprep.subr.bf16.mxu0 0
          %1313 = vmatpush1.bf16.msra.mxu0 0
          %1314 = vmatprep.subr.bf16.mxu0 0
          %1315 = vmatpush1.bf16.msra.mxu0 0
          %1316 = vmatprep.subr.bf16.mxu0 0
          %1317 = vmatpush1.bf16.msra.mxu0 0
          %1318 = vmatprep.subr.bf16.mxu0 0
          %1319 = vmatpush1.bf16.msra.mxu0 0
          %1320 = vmatprep.subr.bf16.mxu0 0
          %1321 = vmatpush1.bf16.msra.mxu0 0
          %1322 = vmatprep.subr.bf16.mxu0 0
          %1323 = vmatpush1.bf16.msra.mxu0 0
          %1324 = vmatprep.subr.bf16.mxu0 0
          %1325 = vmatpush1.bf16.msra.mxu0 0
          %1326 = vmatprep.subr.bf16.mxu0 0
          %1327 = vmatpush1.bf16.msra.mxu0 0
          %1328 = vmatprep.mubr.bf16.mxu0 0
          %1329 = vmatmul.mubr.bf16.gmra.mrb[0].mxu0 %v1291
          %v1330 = vpop.f32.mrb[0].mxu0
          %v1331 = vadd.f32 0.0, %v1330
          %v1332 = vpop.f32.mrb[0].mxu0
          %v1333 = vpop.f32.mrb[0].mxu0
          %v1334 = vpop.f32.mrb[0].mxu0
          %1335 = vdwg.mxu0
          %v1336 = vadd.f32 %v1276, %v1331
          %v1337 = vld [vmem:[%s5] sm:$0x1]
          %v1339 = vlaneseq
          %v1340 = vshrl.u32 %v1339, 7
          %v1341 = vsub.s32 0, %v1340
          %v1342 = vrot.slane %v1337, %v1341
          %v1344 = vadd.f32 %v1336, %v1342
          %vm1345 = vcmask 261120
          %1346 = vst.msk [vmem:[%s359] sm:$0xff] %vm1345, %v1344
        $region72: #{tpu_custom_call.1} parent=43 // pred_fallthru
          _
        %s1347 = sand.u32 %s196, 1
        %s1348 = scalar_lea.sflag [#allocation8], %s1347
        %s1349 = sand.u32 %s196, 1
        %s1350 = smul.addr %s1349, 8
        %s1351 = scalar_lea.vmem [#allocation14], %s1350
        // Predicated region
        $region73: #{tpu_custom_call.1} parent=43 // pred_check
          %p1352 = pneg %p206
        $region74: #{tpu_custom_call.1} parent=43 // pred_check_branch
          %1354 = sbr.rel (%p1352) target = $region76
        $region75: #{tpu_custom_call.1} parent=43 // pred_region
          %s1356 = ssub.s32 128, 128
          %1357 = vsyncadd %s1348, %s1356
          %s1358 = sadd.s32 %s33, %s32
          %s1359 = smul.addr %s1358, 128
          %s1360 = scalar_lea.hbm %s6, %s1359
          %s1362 = sshll.u32 %s1351, 4
          %s1363 = int_to_ptr.vmem [resolvable:$true] %s1362
          %1365 = dma.vmem_to_hbm [thread:$0]  %s1363, 128, %s1360, %s1348
        $region76: #{tpu_custom_call.1} parent=43 // pred_fallthru
          _
      $region44: #{tpu_custom_call.1} parent=5 // pred_fallthru
        _
      %p1366 = scmp.le.s32.totalorder 2, %s22
      // Predicated region
      $region77: #{tpu_custom_call.1} parent=5 // pred_check
        %p1367 = pneg %p1366
      $region78: #{tpu_custom_call.1} parent=5 // pred_check_branch
        %1369 = sbr.rel (%p1367) target = $region80
      $region79: #{tpu_custom_call.1} parent=5 // pred_region
        %s1370 = ssub.s32 %s22, 2
        // Predicated region
        $region81: #{tpu_custom_call.1} parent=79 // pred_check
          %p1371 = pneg %p212
        $region82: #{tpu_custom_call.1} parent=79 // pred_check_branch
          %1373 = sbr.rel (%p1371) target = $region84
        $region83: #{tpu_custom_call.1} parent=79 // pred_region
          %s1374 = sand.u32 %s197, 1
          %s1375 = scalar_lea.sflag [#allocation8], %s1374
          %s1376 = sand.u32 %s197, 1
          %s1377 = smul.addr %s1376, 8
          %s1378 = scalar_lea.vmem [#allocation14], %s1377
          %1379 = dma.done %s1375, 128
        $region84: #{tpu_custom_call.1} parent=79 // pred_fallthru
          _
      $region80: #{tpu_custom_call.1} parent=5 // pred_fallthru
        _
    $region6: #{tpu_custom_call.1} parent=1 // loop_footer
      %s26 = sadd.s32 1, %s22
    $region7: #{tpu_custom_call.1} parent=1 // loop_footer_branch
      %21 = sbr.rel target = $region3
    $region8: #{tpu_custom_call.1} parent=1 // loop_exit
      _
    %1380 = vsyncpa [#allocation7], 1
    %s1381 = scalar_lea.sflag [#allocation7], 1
    %1382 = vsyncpa %s1381, 1
    %1383 = vsyncpa [#allocation10], 1
    %s1384 = scalar_lea.sflag [#allocation10], 1
    %1385 = vsyncpa %s1384, 1
    %1386 = vsyncpa [#allocation13], 1
    %1387 = vsyncpa [#allocation8], 1
    %s1388 = scalar_lea.sflag [#allocation8], 1
    %1389 = vsyncpa %s1388, 1

</llo_original>
